<compile_context>
chip_gen: v7x
topology: tpu7x:2x2x1
jax: 0.10.0
libtpu: 0.0.40
codegen_flags: <defaults>
</compile_context>

<pallas_src>
import jax
import jax.numpy as jnp
from jax.experimental import pallas as pl
from jax.experimental.pallas import tpu as pltpu

EPS = 1e-5
H1, H2 = 1024, 512


def _round_up(x, m):
    return ((x + m - 1) // m) * m


def _dense_kernel(deep_ref, wide_ref,
                  w1_ref, b1_ref, w2_ref, b2_ref, w3_ref, b3_ref,
                  out_ref):
    # Normalization is pre-folded into w1/b1 in the wrapper.
    x = deep_ref[...].astype(jnp.bfloat16)                      # (TB, E) bf16

    # --- Linear(E, 1024) + ReLU (MXU, f32 accumulation) ---
    h1 = jnp.dot(x, w1_ref[...], preferred_element_type=jnp.float32) + b1_ref[...]
    h1 = jnp.maximum(h1, 0.0)

    # --- Linear(1024, 512) + ReLU (MXU, f32 accumulation) ---
    h2 = jnp.dot(h1.astype(jnp.bfloat16), w2_ref[...],
                 preferred_element_type=jnp.float32) + b2_ref[...]
    h2 = jnp.maximum(h2, 0.0)                                   # (TB, 512) f32

    # --- Linear(512, 1) as VPU multiply + lane reduction (MXU stays free) ---
    d = jnp.sum(h2 * w3_ref[...], axis=-1, keepdims=True) + b3_ref[...]  # (TB, 1)

    # --- wide + deep, sigmoid ---
    out_ref[...] = jax.nn.sigmoid(wide_ref[...] + d)


def _vmem_limit_bytes(TB, E):
    # bf16 weights (double-buffered by the pipeline is irrelevant: grid-invariant
    # index maps -> resident once), f32 biases / w3 row.
    weights = E * H1 * 2 + H1 * H2 * 2 + (H1 + H2 + H2 + 1) * 4
    # double-buffered per-step input/output tiles
    io_tiles = 2 * 2 * TB * (E + 1 + 1) * 4
    # in-kernel intermediates (h1/h2 in f32 + bf16 temporaries, rough)
    intermediates = TB * (H1 + H1 + H2 + H2) * 4
    est = weights + io_tiles + intermediates
    # 2x headroom for compiler scratch/spill; stay well under v7x's 64 MiB.
    return int(min(max(2 * est, 16 << 20), 48 << 20))


def dense_module_forward(wide, deep, params):
    """wide: (B, 1) f32, deep: (B, E) f32 -> (B, 1) f32."""
    B, E = deep.shape

    # ---- Fold normalization into the first Linear (static, outside kernel) ----
    scale = params["gamma"] * jax.lax.rsqrt(params["var"] + EPS)   # (1, E)
    shift = params["beta"] - params["mean"] * scale                # (1, E)
    w1 = (params["w1"] * scale.reshape(E, 1)).astype(jnp.bfloat16)  # (E, 1024)
    b1 = (params["b1"] + shift @ params["w1"]).astype(jnp.float32)  # (1, 1024)
    w2 = params["w2"].astype(jnp.bfloat16)                          # (1024, 512)
    b2 = params["b2"].astype(jnp.float32)                           # (1, 512)
    w3_row = params["w3"].reshape(1, H2).astype(jnp.float32)        # (1, 512)
    b3 = params["b3"].astype(jnp.float32)                           # (1, 1)

    # ---- Batch tiling: >=256 rows per step when possible (fills MXU rows) ----
    TB = min(256, _round_up(B, 8))
    Bp = _round_up(B, TB)
    if Bp != B:
        deep = jnp.pad(deep, ((0, Bp - B), (0, 0)))
        wide = jnp.pad(wide, ((0, Bp - B), (0, 0)))
    grid = (Bp // TB,)

    in_specs = [
        pl.BlockSpec((TB, E), lambda i: (i, 0)),       # deep (batch-tiled)
        pl.BlockSpec((TB, 1), lambda i: (i, 0)),       # wide (batch-tiled)
        pl.BlockSpec((E, H1), lambda i: (0, 0)),       # w1 (bf16, grid-invariant)
        pl.BlockSpec((1, H1), lambda i: (0, 0)),       # b1
        pl.BlockSpec((H1, H2), lambda i: (0, 0)),      # w2 (bf16, grid-invariant)
        pl.BlockSpec((1, H2), lambda i: (0, 0)),       # b2
        pl.BlockSpec((1, H2), lambda i: (0, 0)),       # w3 as a row
        pl.BlockSpec((1, 1), lambda i: (0, 0)),        # b3
    ]
    out_specs = pl.BlockSpec((TB, 1), lambda i: (i, 0))

    out = pl.pallas_call(
        _dense_kernel,
        out_shape=jax.ShapeDtypeStruct((Bp, 1), jnp.float32),
        grid=grid,
        in_specs=in_specs,
        out_specs=out_specs,
        compiler_params=pltpu.CompilerParams(
            dimension_semantics=("parallel",),
            vmem_limit_bytes=_vmem_limit_bytes(TB, E)),
    )(deep, wide, w1, b1, w2, b2, w3_row, b3)

    return out[:B]


def init_params(key, emb_output_size):
    """Deterministic synthetic parameters matching DenseModule's shapes."""
    E = emb_output_size
    ks = jax.random.split(key, 8)
    return {
        # Normalization(E)
        "mean":  jax.random.normal(ks[0], (1, E), jnp.float32) * 0.1,
        "var":   jnp.abs(jax.random.normal(ks[1], (1, E), jnp.float32)) + 0.5,
        "gamma": jnp.ones((1, E), jnp.float32),
        "beta":  jnp.zeros((1, E), jnp.float32),
        # Linear(E, 1024)
        "w1": jax.random.normal(ks[2], (E, H1), jnp.float32) * (1.0 / jnp.sqrt(E)),
        "b1": jax.random.normal(ks[3], (1, H1), jnp.float32) * 0.01,
        # Linear(1024, 512)
        "w2": jax.random.normal(ks[4], (H1, H2), jnp.float32) * (1.0 / jnp.sqrt(1.0 * H1)),
        "b2": jax.random.normal(ks[5], (1, H2), jnp.float32) * 0.01,
        # Linear(512, 1)
        "w3": jax.random.normal(ks[6], (H2, 1), jnp.float32) * (1.0 / jnp.sqrt(1.0 * H2)),
        "b3": jax.random.normal(ks[7], (1, 1), jnp.float32) * 0.01,
    }


def reference_forward(wide, deep, p):
    x = (deep - p["mean"]) / jnp.sqrt(p["var"] + EPS) * p["gamma"] + p["beta"]
    h1 = jnp.maximum(x @ p["w1"] + p["b1"], 0.0)
    h2 = jnp.maximum(h1 @ p["w2"] + p["b2"], 0.0)
    d = h2 @ p["w3"] + p["b3"]
    return jax.nn.sigmoid(wide + d)


if __name__ == "__main__":
    key = jax.random.PRNGKey(0)
    k_deep, k_wide, k_params = jax.random.split(key, 3)

    # --- small demo shapes ---
    B, E = 8, 32
    deep = jax.random.normal(k_deep, (B, E), jnp.float32)
    wide = jax.random.normal(k_wide, (B, 1), jnp.float32)
    params = init_params(k_params, E)

    out = jax.block_until_ready(dense_module_forward(wide, deep, params))
    ref = reference_forward(wide, deep, params)
    assert out.shape == (B, 1) and out.dtype == jnp.float32
    # bf16 matmul operands (f32 accumulation) -> relaxed tolerance vs f32 reference.
    assert jnp.allclose(out, ref, atol=2e-2, rtol=2e-2)

    # --- second check: non-aligned batch exercising padding + multi-step grid ---
    B2 = 300
    deep2 = jax.random.normal(jax.random.PRNGKey(1), (B2, E), jnp.float32)
    wide2 = jax.random.normal(jax.random.PRNGKey(2), (B2, 1), jnp.float32)
    out2 = jax.block_until_ready(dense_module_forward(wide2, deep2, params))
    ref2 = reference_forward(wide2, deep2, params)
    assert out2.shape == (B2, 1)
    assert jnp.allclose(out2, ref2, atol=2e-2, rtol=2e-2)

    print("KERNEL_OK")
</pallas_src>

<mosaic_0001>
module attributes {stable_mosaic.version = 11 : i64} {
  func.func @_dense_kernel(%arg0: i32, %arg1: memref<8x32xf32, #tpu.memory_space<vmem>>, %arg2: memref<8x1xf32, #tpu.memory_space<vmem>>, %arg3: memref<32x1024xbf16, #tpu.memory_space<vmem>>, %arg4: memref<1x1024xf32, #tpu.memory_space<vmem>>, %arg5: memref<1024x512xbf16, #tpu.memory_space<vmem>>, %arg6: memref<1x512xf32, #tpu.memory_space<vmem>>, %arg7: memref<1x512xf32, #tpu.memory_space<vmem>>, %arg8: memref<1x1xf32, #tpu.memory_space<vmem>>, %arg9: memref<8x1xf32, #tpu.memory_space<vmem>>) attributes {dimension_semantics = [#tpu.dimension_semantics<parallel>], iteration_bounds = array<i64: 1>, scalar_prefetch = 0 : i64, scratch_operands = 0 : i64, tpu.core_type = #tpu.core_type<tc>, window_params = [{transform_indices = @transform_0, window_bounds = array<i64: 8, 32>}, {transform_indices = @transform_1, window_bounds = array<i64: 8, 1>}, {pipeline_mode = #tpu.pipeline_mode<synchronous>, transform_indices = @transform_2, window_bounds = array<i64: 32, 1024>}, {pipeline_mode = #tpu.pipeline_mode<synchronous>, transform_indices = @transform_3, window_bounds = array<i64: 1, 1024>}, {pipeline_mode = #tpu.pipeline_mode<synchronous>, transform_indices = @transform_4, window_bounds = array<i64: 1024, 512>}, {pipeline_mode = #tpu.pipeline_mode<synchronous>, transform_indices = @transform_5, window_bounds = array<i64: 1, 512>}, {pipeline_mode = #tpu.pipeline_mode<synchronous>, transform_indices = @transform_6, window_bounds = array<i64: 1, 512>}, {pipeline_mode = #tpu.pipeline_mode<synchronous>, transform_indices = @transform_7, window_bounds = array<i64: 1, 1>}, {transform_indices = @transform_8, window_bounds = array<i64: 8, 1>}]} {
    %c0 = arith.constant 0 : index
    %c0_0 = arith.constant 0 : index
    %0 = vector.load %arg1[%c0, %c0_0] : memref<8x32xf32, #tpu.memory_space<vmem>>, vector<8x32xf32>
    %1 = arith.truncf %0 : vector<8x32xf32> to vector<8x32xbf16>
    %c0_1 = arith.constant 0 : index
    %c0_2 = arith.constant 0 : index
    %2 = vector.load %arg3[%c0_1, %c0_2] : memref<32x1024xbf16, #tpu.memory_space<vmem>>, vector<32x1024xbf16>
    %cst = arith.constant dense<0.000000e+00> : vector<8x1024xf32>
    %3 = tpu.matmul %1, %2, %cst {dimension_numbers = #tpu.dot_dimension_numbers<[1], [0], [0], [1], [0, 0, 1, 1], [], []>} : vector<8x32xbf16>, vector<32x1024xbf16>, vector<8x1024xf32> -> vector<8x1024xf32>
    %c0_3 = arith.constant 0 : index
    %c0_4 = arith.constant 0 : index
    %4 = vector.load %arg4[%c0_3, %c0_4] : memref<1x1024xf32, #tpu.memory_space<vmem>>, vector<1x1024xf32>
    %5 = vector.broadcast %4 : vector<1x1024xf32> to vector<8x1024xf32>
    %6 = arith.addf %3, %5 : vector<8x1024xf32>
    %cst_5 = arith.constant 0.000000e+00 : f32
    %7 = vector.broadcast %cst_5 : f32 to vector<8x1024xf32>
    %8 = arith.maximumf %6, %7 : vector<8x1024xf32>
    %9 = arith.truncf %8 : vector<8x1024xf32> to vector<8x1024xbf16>
    %c0_6 = arith.constant 0 : index
    %c0_7 = arith.constant 0 : index
    %10 = vector.load %arg5[%c0_6, %c0_7] : memref<1024x512xbf16, #tpu.memory_space<vmem>>, vector<1024x512xbf16>
    %cst_8 = arith.constant dense<0.000000e+00> : vector<8x512xf32>
    %11 = tpu.matmul %9, %10, %cst_8 {dimension_numbers = #tpu.dot_dimension_numbers<[1], [0], [0], [1], [0, 0, 1, 1], [], []>} : vector<8x1024xbf16>, vector<1024x512xbf16>, vector<8x512xf32> -> vector<8x512xf32>
    %c0_9 = arith.constant 0 : index
    %c0_10 = arith.constant 0 : index
    %12 = vector.load %arg6[%c0_9, %c0_10] : memref<1x512xf32, #tpu.memory_space<vmem>>, vector<1x512xf32>
    %13 = vector.broadcast %12 : vector<1x512xf32> to vector<8x512xf32>
    %14 = arith.addf %11, %13 : vector<8x512xf32>
    %cst_11 = arith.constant 0.000000e+00 : f32
    %15 = vector.broadcast %cst_11 : f32 to vector<8x512xf32>
    %16 = arith.maximumf %14, %15 : vector<8x512xf32>
    %c0_12 = arith.constant 0 : index
    %c0_13 = arith.constant 0 : index
    %17 = vector.load %arg7[%c0_12, %c0_13] : memref<1x512xf32, #tpu.memory_space<vmem>>, vector<1x512xf32>
    %18 = vector.broadcast %17 : vector<1x512xf32> to vector<8x512xf32>
    %19 = arith.mulf %16, %18 : vector<8x512xf32>
    %cst_14 = arith.constant dense<0.000000e+00> : vector<8xf32>
    %20 = vector.multi_reduction <add>, %19, %cst_14 [1] : vector<8x512xf32> to vector<8xf32>
    %21 = vector.shape_cast %20 : vector<8xf32> to vector<8x1xf32>
    %c0_15 = arith.constant 0 : index
    %c0_16 = arith.constant 0 : index
    %22 = vector.load %arg8[%c0_15, %c0_16] : memref<1x1xf32, #tpu.memory_space<vmem>>, vector<1x1xf32>
    %23 = vector.broadcast %22 : vector<1x1xf32> to vector<8x1xf32>
    %24 = arith.addf %21, %23 : vector<8x1xf32>
    %c0_17 = arith.constant 0 : index
    %c0_18 = arith.constant 0 : index
    %25 = vector.load %arg2[%c0_17, %c0_18] : memref<8x1xf32, #tpu.memory_space<vmem>>, vector<8x1xf32>
    %26 = arith.addf %25, %24 : vector<8x1xf32>
    %27 = arith.negf %26 : vector<8x1xf32>
    %28 = math.exp %27 : vector<8x1xf32>
    %cst_19 = arith.constant 1.000000e+00 : f32
    %29 = vector.broadcast %cst_19 : f32 to vector<8x1xf32>
    %30 = arith.addf %29, %28 : vector<8x1xf32>
    %31 = arith.divf %29, %30 : vector<8x1xf32>
    %c0_20 = arith.constant 0 : index
    %c0_21 = arith.constant 0 : index
    %32 = vector.load %arg9[%c0_20, %c0_21] : memref<8x1xf32, #tpu.memory_space<vmem>>, vector<8x1xf32>
    tpu.vector_store %arg9[%c0_20, %c0_21], %31 {strides = array<i32>} : memref<8x1xf32, #tpu.memory_space<vmem>>, vector<8x1xf32>,
    return
  }
  func.func @transform_0(%arg0: i32) -> (i32, i32) {
    %c0_i32 = arith.constant 0 : i32
    %c0_i32_0 = arith.constant 0 : i32
    return %arg0, %c0_i32 : i32, i32
  }
  func.func @transform_1(%arg0: i32) -> (i32, i32) {
    %c0_i32 = arith.constant 0 : i32
    %c0_i32_0 = arith.constant 0 : i32
    return %arg0, %c0_i32 : i32, i32
  }
  func.func @transform_2(%arg0: i32) -> (i32, i32) {
    %c0_i32 = arith.constant 0 : i32
    %c0_i32_0 = arith.constant 0 : i32
    %c0_i32_1 = arith.constant 0 : i32
    return %c0_i32, %c0_i32_0 : i32, i32
  }
  func.func @transform_3(%arg0: i32) -> (i32, i32) {
    %c0_i32 = arith.constant 0 : i32
    %c0_i32_0 = arith.constant 0 : i32
    %c0_i32_1 = arith.constant 0 : i32
    return %c0_i32, %c0_i32_0 : i32, i32
  }
  func.func @transform_4(%arg0: i32) -> (i32, i32) {
    %c0_i32 = arith.constant 0 : i32
    %c0_i32_0 = arith.constant 0 : i32
    %c0_i32_1 = arith.constant 0 : i32
    return %c0_i32, %c0_i32_0 : i32, i32
  }
  func.func @transform_5(%arg0: i32) -> (i32, i32) {
    %c0_i32 = arith.constant 0 : i32
    %c0_i32_0 = arith.constant 0 : i32
    %c0_i32_1 = arith.constant 0 : i32
    return %c0_i32, %c0_i32_0 : i32, i32
  }
  func.func @transform_6(%arg0: i32) -> (i32, i32) {
    %c0_i32 = arith.constant 0 : i32
    %c0_i32_0 = arith.constant 0 : i32
    %c0_i32_1 = arith.constant 0 : i32
    return %c0_i32, %c0_i32_0 : i32, i32
  }
  func.func @transform_7(%arg0: i32) -> (i32, i32) {
    %c0_i32 = arith.constant 0 : i32
    %c0_i32_0 = arith.constant 0 : i32
    %c0_i32_1 = arith.constant 0 : i32
    return %c0_i32, %c0_i32_0 : i32, i32
  }
  func.func @transform_8(%arg0: i32) -> (i32, i32) {
    %c0_i32 = arith.constant 0 : i32
    %c0_i32_0 = arith.constant 0 : i32
    return %arg0, %c0_i32 : i32, i32
  }
}

</mosaic_0001>

<llo_original>
// kernel: tpu_custom_call.1
$region0: #{tpu_custom_call.1}
  #allocation0 [shape = 'u32[]', space=smem, size = 0x4, offset = 0x4, fixed_abs, tag = 'smem constant byte address 0x4 - core index']
  #allocation1 [shape = 'u32[144,128]{1,0:T(1,128)}', space=vmem, size = 0x12000, scoped, tag = 'internal scratch']
  #allocation2 [shape = 'f32[1,1]{1,0:T(1,128)S(1)}', space=vmem, size = 0x200, scoped, tag = 'scoped memory for tpu_custom_call.1']
  %s0 = inlined_call_operand.vmem [shape: f32[8,32], index: 0, kind: input, shape index: {}]
  %s1 = inlined_call_operand.vmem [shape: f32[8,1], index: 1, kind: input, shape index: {}]
  %s2 = inlined_call_operand.hbm [shape: bf16[32,1024], index: 2, kind: input, shape index: {}]
  %s3 = inlined_call_operand.vmem [shape: f32[1,1024], index: 3, kind: input, shape index: {}]
  %s4 = inlined_call_operand.hbm [shape: bf16[1024,512], index: 4, kind: input, shape index: {}]
  %s5 = inlined_call_operand.vmem [shape: f32[1,512], index: 5, kind: input, shape index: {}]
  %s6 = inlined_call_operand.vmem [shape: f32[1,512], index: 6, kind: input, shape index: {}]
  %s7 = inlined_call_operand.<no memory space> [shape: f32[1,1], index: 7, kind: input, shape index: {}]
  %s8 = inlined_call_operand.vmem [shape: f32[8,1], index: 8, kind: output, shape index: {}]
  %s9 = sld [smem:[#allocation0]]
  $region50: #{tpu_custom_call.1} parent=0
    _
  %s11 = ssub.s32 1, %s9
  %s12 = scalar_select 0, %s11, %s9
  %v13 = vstv %s7
  %14 = vst [vmem:[#allocation2] sm:$0x1] %v13
  $region1: #{tpu_custom_call.1} parent=0
    #allocation3 [shape = 'u8[65536]{0}', space=vmem, size = 0x10000, scoped, tag = 'input window, operand 2, single buffered']
    #allocation4 [shape = 's32[1]{0}', space=sflag, size = 0x4, scoped, tag = 'scoped memory for tpu_custom_call.1']
    #allocation5 [shape = 'u8[1048576]{0}', space=vmem, size = 0x100000, scoped, tag = 'input window, operand 4, single buffered']
    #allocation6 [shape = 's32[1]{0}', space=sflag, size = 0x4, scoped, tag = 'scoped memory for tpu_custom_call.1']
    %15 = vsyncpa [#allocation4], 0
    %16 = vsyncpa [#allocation6], 0
    // Predicated region
    $region2: #{tpu_custom_call.1} parent=1 // pred_check
      _
    $region3: #{tpu_custom_call.1} parent=1 // pred_check_branch
      %18 = sbr.rel (0) target = $region5
    $region4: #{tpu_custom_call.1} parent=1 // pred_region
      _
    $region5: #{tpu_custom_call.1} parent=1 // pred_fallthru
      _
    // Predicated region
    $region6: #{tpu_custom_call.1} parent=1 // pred_check
      _
    $region7: #{tpu_custom_call.1} parent=1 // pred_check_branch
      %20 = sbr.rel (0) target = $region9
    $region8: #{tpu_custom_call.1} parent=1 // pred_region
      _
    $region9: #{tpu_custom_call.1} parent=1 // pred_fallthru
      _
    // Predicated region
    $region10: #{tpu_custom_call.1} parent=1 // pred_check
      _
    $region11: #{tpu_custom_call.1} parent=1 // pred_check_branch
      %22 = sbr.rel (0) target = $region13
    $region12: #{tpu_custom_call.1} parent=1 // pred_region
      %s24 = ssub.s32 2048, 2048
      %25 = vsyncadd [#allocation4], %s24
      %s26 = sshll.u32 [#allocation3], 4
      %s27 = int_to_ptr.vmem [resolvable:$true] %s26
      %32 = dma.hbm_to_vmem [thread:$0]  %s2, 2048, %s27, [#allocation4], 512, 512, 32
    $region13: #{tpu_custom_call.1} parent=1 // pred_fallthru
      _
    // Predicated region
    $region14: #{tpu_custom_call.1} parent=1 // pred_check
      _
    $region15: #{tpu_custom_call.1} parent=1 // pred_check_branch
      %34 = sbr.rel (0) target = $region17
    $region16: #{tpu_custom_call.1} parent=1 // pred_region
      _
    $region17: #{tpu_custom_call.1} parent=1 // pred_fallthru
      _
    // Predicated region
    $region18: #{tpu_custom_call.1} parent=1 // pred_check
      _
    $region19: #{tpu_custom_call.1} parent=1 // pred_check_branch
      %36 = sbr.rel (0) target = $region21
    $region20: #{tpu_custom_call.1} parent=1 // pred_region
      %s38 = ssub.s32 32768, 32768
      %39 = vsyncadd [#allocation6], %s38
      %s40 = sshll.u32 [#allocation5], 4
      %s41 = int_to_ptr.vmem [resolvable:$true] %s40
      %46 = dma.hbm_to_vmem [thread:$0]  %s4, 32768, %s41, [#allocation6], 256, 256, 16
    $region21: #{tpu_custom_call.1} parent=1 // pred_fallthru
      _
    // Predicated region
    $region22: #{tpu_custom_call.1} parent=1 // pred_check
      _
    $region23: #{tpu_custom_call.1} parent=1 // pred_check_branch
      %48 = sbr.rel (0) target = $region25
    $region24: #{tpu_custom_call.1} parent=1 // pred_region
      _
    $region25: #{tpu_custom_call.1} parent=1 // pred_fallthru
      _
    // Predicated region
    $region26: #{tpu_custom_call.1} parent=1 // pred_check
      _
    $region27: #{tpu_custom_call.1} parent=1 // pred_check_branch
      %50 = sbr.rel (0) target = $region29
    $region28: #{tpu_custom_call.1} parent=1 // pred_region
      _
    $region29: #{tpu_custom_call.1} parent=1 // pred_fallthru
      _
    // Predicated region
    $region30: #{tpu_custom_call.1} parent=1 // pred_check
      _
    $region31: #{tpu_custom_call.1} parent=1 // pred_check_branch
      %52 = sbr.rel (0) target = $region33
    $region32: #{tpu_custom_call.1} parent=1 // pred_region
      _
    $region33: #{tpu_custom_call.1} parent=1 // pred_fallthru
      _
    // Predicated region
    $region34: #{tpu_custom_call.1} parent=1 // pred_check
      _
    $region35: #{tpu_custom_call.1} parent=1 // pred_check_branch
      %54 = sbr.rel (0) target = $region37
    $region36: #{tpu_custom_call.1} parent=1 // pred_region
      %55 = dma.done [#allocation4], 2048
    $region37: #{tpu_custom_call.1} parent=1 // pred_fallthru
      _
    // Predicated region
    $region38: #{tpu_custom_call.1} parent=1 // pred_check
      _
    $region39: #{tpu_custom_call.1} parent=1 // pred_check_branch
      %57 = sbr.rel (0) target = $region41
    $region40: #{tpu_custom_call.1} parent=1 // pred_region
      %58 = dma.done [#allocation6], 32768
    $region41: #{tpu_custom_call.1} parent=1 // pred_fallthru
      _
    %v60 = vld [vmem:[%s0] sm:$0xff]
    %v61 = vpack.c.bf16 %v60, %v60
    %v62 = vld [vmem:[#allocation3] sm:$0xff]
    %v63 = vld [vmem:[#allocation3 + $0x8] sm:$0xff]
    %v64 = vld [vmem:[#allocation3 + $0x10] sm:$0xff]
    %v65 = vld [vmem:[#allocation3 + $0x18] sm:$0xff]
    %v66 = vld [vmem:[#allocation3 + $0x20] sm:$0xff]
    %v67 = vld [vmem:[#allocation3 + $0x28] sm:$0xff]
    %v68 = vld [vmem:[#allocation3 + $0x30] sm:$0xff]
    %v69 = vld [vmem:[#allocation3 + $0x38] sm:$0xff]
    %v70 = vld [vmem:[#allocation3 + $0x40] sm:$0xff]
    %v71 = vld [vmem:[#allocation3 + $0x48] sm:$0xff]
    %v72 = vld [vmem:[#allocation3 + $0x50] sm:$0xff]
    %v73 = vld [vmem:[#allocation3 + $0x58] sm:$0xff]
    %v74 = vld [vmem:[#allocation3 + $0x60] sm:$0xff]
    %v75 = vld [vmem:[#allocation3 + $0x68] sm:$0xff]
    %v76 = vld [vmem:[#allocation3 + $0x70] sm:$0xff]
    %v77 = vld [vmem:[#allocation3 + $0x78] sm:$0xff]
    %v78 = vld [vmem:[%s3] sm:$0xff]
    %v80 = vlaneseq
    %v81 = vshrl.u32 %v80, 7
    %v82 = vsub.s32 0, %v81
    %v83 = vrot.slane %v78, %v82
    %v84 = vlaneseq
    %v85 = vshrl.u32 %v84, 7
    %v86 = vsub.s32 1, %v85
    %v87 = vrot.slane %v78, %v86
    %v88 = vlaneseq
    %v89 = vshrl.u32 %v88, 7
    %v90 = vsub.s32 2, %v89
    %v91 = vrot.slane %v78, %v90
    %v92 = vlaneseq
    %v93 = vshrl.u32 %v92, 7
    %v94 = vsub.s32 3, %v93
    %v95 = vrot.slane %v78, %v94
    %v96 = vlaneseq
    %v97 = vshrl.u32 %v96, 7
    %v98 = vsub.s32 4, %v97
    %v99 = vrot.slane %v78, %v98
    %v100 = vlaneseq
    %v101 = vshrl.u32 %v100, 7
    %v102 = vsub.s32 5, %v101
    %v103 = vrot.slane %v78, %v102
    %v104 = vlaneseq
    %v105 = vshrl.u32 %v104, 7
    %v106 = vsub.s32 6, %v105
    %v107 = vrot.slane %v78, %v106
    %v108 = vlaneseq
    %v109 = vshrl.u32 %v108, 7
    %v110 = vsub.s32 7, %v109
    %v111 = vrot.slane %v78, %v110
    %v136 = vunpack.c.l.b16 %v62
    %v137 = vunpack.c.h.b16 %v62
    %v138 = vunpack.c.l.b16 %v63
    %v139 = vunpack.c.h.b16 %v63
    %v140 = vunpack.c.l.b16 %v64
    %v141 = vunpack.c.h.b16 %v64
    %v142 = vunpack.c.l.b16 %v65
    %v143 = vunpack.c.h.b16 %v65
    %v144 = vunpack.c.l.b16 %v66
    %v145 = vunpack.c.h.b16 %v66
    %v146 = vunpack.c.l.b16 %v67
    %v147 = vunpack.c.h.b16 %v67
    %v148 = vunpack.c.l.b16 %v68
    %v149 = vunpack.c.h.b16 %v68
    %v150 = vunpack.c.l.b16 %v69
    %v151 = vunpack.c.h.b16 %v69
    %v152 = vunpack.c.l.b16 %v70
    %v153 = vunpack.c.h.b16 %v70
    %v154 = vunpack.c.l.b16 %v71
    %v155 = vunpack.c.h.b16 %v71
    %v156 = vunpack.c.l.b16 %v72
    %v157 = vunpack.c.h.b16 %v72
    %v158 = vunpack.c.l.b16 %v73
    %v159 = vunpack.c.h.b16 %v73
    %v160 = vunpack.c.l.b16 %v74
    %v161 = vunpack.c.h.b16 %v74
    %v162 = vunpack.c.l.b16 %v75
    %v163 = vunpack.c.h.b16 %v75
    %v164 = vunpack.c.l.b16 %v76
    %v165 = vunpack.c.h.b16 %v76
    %v166 = vunpack.c.l.b16 %v77
    %v167 = vunpack.c.h.b16 %v77
    %v168 = vpack.c.b16 %v144, %v136
    %v169 = vpack.c.b16 %v145, %v137
    %v170 = vpack.c.b16 %v146, %v138
    %v171 = vpack.c.b16 %v147, %v139
    %v172 = vpack.c.b16 %v148, %v140
    %v173 = vpack.c.b16 %v149, %v141
    %v174 = vpack.c.b16 %v150, %v142
    %v175 = vpack.c.b16 %v151, %v143
    %v176 = vpack.c.b16 %v160, %v152
    %v177 = vpack.c.b16 %v161, %v153
    %v178 = vpack.c.b16 %v162, %v154
    %v179 = vpack.c.b16 %v163, %v155
    %v180 = vpack.c.b16 %v164, %v156
    %v181 = vpack.c.b16 %v165, %v157
    %v182 = vpack.c.b16 %v166, %v158
    %v183 = vpack.c.b16 %v167, %v159
    %vm200 = vcmask 261120
    %v202 = vsel %vm200, %v61, 0
    %204 = vmatprep.subr.bf16.mxu0 %v169
    %205 = vmatpush1.bf16.msra.mxu0 %v168
    %206 = vmatprep.subr.bf16.mxu0 %v177
    %207 = vmatpush1.bf16.msra.mxu0 %v176
    %208 = vmatprep.subr.bf16.mxu0 0
    %209 = vmatpush1.bf16.msra.mxu0 0
    %210 = vmatprep.subr.bf16.mxu0 0
    %211 = vmatpush1.bf16.msra.mxu0 0
    %212 = vmatprep.subr.bf16.mxu0 0
    %213 = vmatpush1.bf16.msra.mxu0 0
    %214 = vmatprep.subr.bf16.mxu0 0
    %215 = vmatpush1.bf16.msra.mxu0 0
    %216 = vmatprep.subr.bf16.mxu0 0
    %217 = vmatpush1.bf16.msra.mxu0 0
    %218 = vmatprep.subr.bf16.mxu0 0
    %219 = vmatpush1.bf16.msra.mxu0 0
    %220 = vmatprep.subr.bf16.mxu0 0
    %221 = vmatpush1.bf16.msra.mxu0 0
    %222 = vmatprep.subr.bf16.mxu0 0
    %223 = vmatpush1.bf16.msra.mxu0 0
    %224 = vmatprep.subr.bf16.mxu0 0
    %225 = vmatpush1.bf16.msra.mxu0 0
    %226 = vmatprep.subr.bf16.mxu0 0
    %227 = vmatpush1.bf16.msra.mxu0 0
    %228 = vmatprep.subr.bf16.mxu0 0
    %229 = vmatpush1.bf16.msra.mxu0 0
    %230 = vmatprep.subr.bf16.mxu0 0
    %231 = vmatpush1.bf16.msra.mxu0 0
    %232 = vmatprep.subr.bf16.mxu0 0
    %233 = vmatpush1.bf16.msra.mxu0 0
    %234 = vmatprep.subr.bf16.mxu0 0
    %235 = vmatpush1.bf16.msra.mxu0 0
    %236 = vmatprep.mubr.bf16.mxu0 0
    %237 = vmatmul.mubr.bf16.gmra.mrb[0].mxu0 %v202
    %v238 = vpop.f32.mrb[0].mxu0
    %v239 = vadd.f32 %v83, %v238
    %v240 = vpop.f32.mrb[0].mxu0
    %v241 = vadd.f32 %v87, %v240
    %v242 = vpop.f32.mrb[0].mxu0
    %v243 = vpop.f32.mrb[0].mxu0
    %244 = vdwg.mxu0
    %245 = vmatprep.subr.bf16.mxu0 %v171
    %246 = vmatpush1.bf16.msra.mxu0 %v170
    %247 = vmatprep.subr.bf16.mxu0 %v179
    %248 = vmatpush1.bf16.msra.mxu0 %v178
    %249 = vmatprep.subr.bf16.mxu0 0
    %250 = vmatpush1.bf16.msra.mxu0 0
    %251 = vmatprep.subr.bf16.mxu0 0
    %252 = vmatpush1.bf16.msra.mxu0 0
    %253 = vmatprep.subr.bf16.mxu0 0
    %254 = vmatpush1.bf16.msra.mxu0 0
    %255 = vmatprep.subr.bf16.mxu0 0
    %256 = vmatpush1.bf16.msra.mxu0 0
    %257 = vmatprep.subr.bf16.mxu0 0
    %258 = vmatpush1.bf16.msra.mxu0 0
    %259 = vmatprep.subr.bf16.mxu0 0
    %260 = vmatpush1.bf16.msra.mxu0 0
    %261 = vmatprep.subr.bf16.mxu0 0
    %262 = vmatpush1.bf16.msra.mxu0 0
    %263 = vmatprep.subr.bf16.mxu0 0
    %264 = vmatpush1.bf16.msra.mxu0 0
    %265 = vmatprep.subr.bf16.mxu0 0
    %266 = vmatpush1.bf16.msra.mxu0 0
    %267 = vmatprep.subr.bf16.mxu0 0
    %268 = vmatpush1.bf16.msra.mxu0 0
    %269 = vmatprep.subr.bf16.mxu0 0
    %270 = vmatpush1.bf16.msra.mxu0 0
    %271 = vmatprep.subr.bf16.mxu0 0
    %272 = vmatpush1.bf16.msra.mxu0 0
    %273 = vmatprep.subr.bf16.mxu0 0
    %274 = vmatpush1.bf16.msra.mxu0 0
    %275 = vmatprep.subr.bf16.mxu0 0
    %276 = vmatpush1.bf16.msra.mxu0 0
    %277 = vmatprep.mubr.bf16.mxu0 0
    %278 = vmatmul.mubr.bf16.gmra.mrb[0].mxu0 %v202
    %v279 = vpop.f32.mrb[0].mxu0
    %v280 = vadd.f32 %v91, %v279
    %v281 = vpop.f32.mrb[0].mxu0
    %v282 = vadd.f32 %v95, %v281
    %v283 = vpop.f32.mrb[0].mxu0
    %v284 = vpop.f32.mrb[0].mxu0
    %285 = vdwg.mxu0
    %286 = vmatprep.subr.bf16.mxu0 %v173
    %287 = vmatpush1.bf16.msra.mxu0 %v172
    %288 = vmatprep.subr.bf16.mxu0 %v181
    %289 = vmatpush1.bf16.msra.mxu0 %v180
    %290 = vmatprep.subr.bf16.mxu0 0
    %291 = vmatpush1.bf16.msra.mxu0 0
    %292 = vmatprep.subr.bf16.mxu0 0
    %293 = vmatpush1.bf16.msra.mxu0 0
    %294 = vmatprep.subr.bf16.mxu0 0
    %295 = vmatpush1.bf16.msra.mxu0 0
    %296 = vmatprep.subr.bf16.mxu0 0
    %297 = vmatpush1.bf16.msra.mxu0 0
    %298 = vmatprep.subr.bf16.mxu0 0
    %299 = vmatpush1.bf16.msra.mxu0 0
    %300 = vmatprep.subr.bf16.mxu0 0
    %301 = vmatpush1.bf16.msra.mxu0 0
    %302 = vmatprep.subr.bf16.mxu0 0
    %303 = vmatpush1.bf16.msra.mxu0 0
    %304 = vmatprep.subr.bf16.mxu0 0
    %305 = vmatpush1.bf16.msra.mxu0 0
    %306 = vmatprep.subr.bf16.mxu0 0
    %307 = vmatpush1.bf16.msra.mxu0 0
    %308 = vmatprep.subr.bf16.mxu0 0
    %309 = vmatpush1.bf16.msra.mxu0 0
    %310 = vmatprep.subr.bf16.mxu0 0
    %311 = vmatpush1.bf16.msra.mxu0 0
    %312 = vmatprep.subr.bf16.mxu0 0
    %313 = vmatpush1.bf16.msra.mxu0 0
    %314 = vmatprep.subr.bf16.mxu0 0
    %315 = vmatpush1.bf16.msra.mxu0 0
    %316 = vmatprep.subr.bf16.mxu0 0
    %317 = vmatpush1.bf16.msra.mxu0 0
    %318 = vmatprep.mubr.bf16.mxu0 0
    %319 = vmatmul.mubr.bf16.gmra.mrb[0].mxu0 %v202
    %v320 = vpop.f32.mrb[0].mxu0
    %v321 = vadd.f32 %v99, %v320
    %v322 = vpop.f32.mrb[0].mxu0
    %v323 = vadd.f32 %v103, %v322
    %v324 = vpop.f32.mrb[0].mxu0
    %v325 = vpop.f32.mrb[0].mxu0
    %326 = vdwg.mxu0
    %327 = vmatprep.subr.bf16.mxu0 %v175
    %328 = vmatpush1.bf16.msra.mxu0 %v174
    %329 = vmatprep.subr.bf16.mxu0 %v183
    %330 = vmatpush1.bf16.msra.mxu0 %v182
    %331 = vmatprep.subr.bf16.mxu0 0
    %332 = vmatpush1.bf16.msra.mxu0 0
    %333 = vmatprep.subr.bf16.mxu0 0
    %334 = vmatpush1.bf16.msra.mxu0 0
    %335 = vmatprep.subr.bf16.mxu0 0
    %336 = vmatpush1.bf16.msra.mxu0 0
    %337 = vmatprep.subr.bf16.mxu0 0
    %338 = vmatpush1.bf16.msra.mxu0 0
    %339 = vmatprep.subr.bf16.mxu0 0
    %340 = vmatpush1.bf16.msra.mxu0 0
    %341 = vmatprep.subr.bf16.mxu0 0
    %342 = vmatpush1.bf16.msra.mxu0 0
    %343 = vmatprep.subr.bf16.mxu0 0
    %344 = vmatpush1.bf16.msra.mxu0 0
    %345 = vmatprep.subr.bf16.mxu0 0
    %346 = vmatpush1.bf16.msra.mxu0 0
    %347 = vmatprep.subr.bf16.mxu0 0
    %348 = vmatpush1.bf16.msra.mxu0 0
    %349 = vmatprep.subr.bf16.mxu0 0
    %350 = vmatpush1.bf16.msra.mxu0 0
    %351 = vmatprep.subr.bf16.mxu0 0
    %352 = vmatpush1.bf16.msra.mxu0 0
    %353 = vmatprep.subr.bf16.mxu0 0
    %354 = vmatpush1.bf16.msra.mxu0 0
    %355 = vmatprep.subr.bf16.mxu0 0
    %356 = vmatpush1.bf16.msra.mxu0 0
    %357 = vmatprep.subr.bf16.mxu0 0
    %358 = vmatpush1.bf16.msra.mxu0 0
    %359 = vmatprep.mubr.bf16.mxu0 0
    %360 = vmatmul.mubr.bf16.gmra.mrb[0].mxu0 %v202
    %v361 = vpop.f32.mrb[0].mxu0
    %v362 = vadd.f32 %v107, %v361
    %v363 = vpop.f32.mrb[0].mxu0
    %v364 = vadd.f32 %v111, %v363
    %v365 = vpop.f32.mrb[0].mxu0
    %v366 = vpop.f32.mrb[0].mxu0
    %367 = vdwg.mxu0
    %v368 = vmax.f32 %v239, 0.0
    %v369 = vmax.f32 %v241, 0.0
    %v370 = vmax.f32 %v280, 0.0
    %v371 = vmax.f32 %v282, 0.0
    %v372 = vmax.f32 %v321, 0.0
    %v373 = vmax.f32 %v323, 0.0
    %v374 = vmax.f32 %v362, 0.0
    %v375 = vmax.f32 %v364, 0.0
    %v376 = vpack.c.bf16 %v368, %v368
    %v377 = vpack.c.bf16 %v369, %v369
    %v378 = vpack.c.bf16 %v370, %v370
    %v379 = vpack.c.bf16 %v371, %v371
    %v380 = vpack.c.bf16 %v372, %v372
    %v381 = vpack.c.bf16 %v373, %v373
    %v382 = vpack.c.bf16 %v374, %v374
    %v383 = vpack.c.bf16 %v375, %v375
    %v384 = vld [vmem:[#allocation5] sm:$0xff]
    %v385 = vld [vmem:[#allocation5 + $0x8] sm:$0xff]
    %v386 = vld [vmem:[#allocation5 + $0x10] sm:$0xff]
    %v387 = vld [vmem:[#allocation5 + $0x18] sm:$0xff]
    %v388 = vld [vmem:[#allocation5 + $0x20] sm:$0xff]
    %v389 = vld [vmem:[#allocation5 + $0x28] sm:$0xff]
    %v390 = vld [vmem:[#allocation5 + $0x30] sm:$0xff]
    %v391 = vld [vmem:[#allocation5 + $0x38] sm:$0xff]
    %v392 = vld [vmem:[#allocation5 + $0x40] sm:$0xff]
    %v393 = vld [vmem:[#allocation5 + $0x48] sm:$0xff]
    %v394 = vld [vmem:[#allocation5 + $0x50] sm:$0xff]
    %v395 = vld [vmem:[#allocation5 + $0x58] sm:$0xff]
    %v396 = vld [vmem:[#allocation5 + $0x60] sm:$0xff]
    %v397 = vld [vmem:[#allocation5 + $0x68] sm:$0xff]
    %v398 = vld [vmem:[#allocation5 + $0x70] sm:$0xff]
    %v399 = vld [vmem:[#allocation5 + $0x78] sm:$0xff]
    %v400 = vld [vmem:[#allocation5 + $0x80] sm:$0xff]
    %v401 = vld [vmem:[#allocation5 + $0x88] sm:$0xff]
    %v402 = vld [vmem:[#allocation5 + $0x90] sm:$0xff]
    %v403 = vld [vmem:[#allocation5 + $0x98] sm:$0xff]
    %v404 = vld [vmem:[#allocation5 + $0xa0] sm:$0xff]
    %v405 = vld [vmem:[#allocation5 + $0xa8] sm:$0xff]
    %v406 = vld [vmem:[#allocation5 + $0xb0] sm:$0xff]
    %v407 = vld [vmem:[#allocation5 + $0xb8] sm:$0xff]
    %v408 = vld [vmem:[#allocation5 + $0xc0] sm:$0xff]
    %v409 = vld [vmem:[#allocation5 + $0xc8] sm:$0xff]
    %v410 = vld [vmem:[#allocation5 + $0xd0] sm:$0xff]
    %v411 = vld [vmem:[#allocation5 + $0xd8] sm:$0xff]
    %v412 = vld [vmem:[#allocation5 + $0xe0] sm:$0xff]
    %v413 = vld [vmem:[#allocation5 + $0xe8] sm:$0xff]
    %v414 = vld [vmem:[#allocation5 + $0xf0] sm:$0xff]
    %v415 = vld [vmem:[#allocation5 + $0xf8] sm:$0xff]
    %v416 = vld [vmem:[#allocation5 + $0x100] sm:$0xff]
    %v417 = vld [vmem:[#allocation5 + $0x108] sm:$0xff]
    %v418 = vld [vmem:[#allocation5 + $0x110] sm:$0xff]
    %v419 = vld [vmem:[#allocation5 + $0x118] sm:$0xff]
    %v420 = vld [vmem:[#allocation5 + $0x120] sm:$0xff]
    %v421 = vld [vmem:[#allocation5 + $0x128] sm:$0xff]
    %v422 = vld [vmem:[#allocation5 + $0x130] sm:$0xff]
    %v423 = vld [vmem:[#allocation5 + $0x138] sm:$0xff]
    %v424 = vld [vmem:[#allocation5 + $0x140] sm:$0xff]
    %v425 = vld [vmem:[#allocation5 + $0x148] sm:$0xff]
    %v426 = vld [vmem:[#allocation5 + $0x150] sm:$0xff]
    %v427 = vld [vmem:[#allocation5 + $0x158] sm:$0xff]
    %v428 = vld [vmem:[#allocation5 + $0x160] sm:$0xff]
    %v429 = vld [vmem:[#allocation5 + $0x168] sm:$0xff]
    %v430 = vld [vmem:[#allocation5 + $0x170] sm:$0xff]
    %v431 = vld [vmem:[#allocation5 + $0x178] sm:$0xff]
    %v432 = vld [vmem:[#allocation5 + $0x180] sm:$0xff]
    %v433 = vld [vmem:[#allocation5 + $0x188] sm:$0xff]
    %v434 = vld [vmem:[#allocation5 + $0x190] sm:$0xff]
    %v435 = vld [vmem:[#allocation5 + $0x198] sm:$0xff]
    %v436 = vld [vmem:[#allocation5 + $0x1a0] sm:$0xff]
    %v437 = vld [vmem:[#allocation5 + $0x1a8] sm:$0xff]
    %v438 = vld [vmem:[#allocation5 + $0x1b0] sm:$0xff]
    %v439 = vld [vmem:[#allocation5 + $0x1b8] sm:$0xff]
    %v440 = vld [vmem:[#allocation5 + $0x1c0] sm:$0xff]
    %v441 = vld [vmem:[#allocation5 + $0x1c8] sm:$0xff]
    %v442 = vld [vmem:[#allocation5 + $0x1d0] sm:$0xff]
    %v443 = vld [vmem:[#allocation5 + $0x1d8] sm:$0xff]
    %v444 = vld [vmem:[#allocation5 + $0x1e0] sm:$0xff]
    %v445 = vld [vmem:[#allocation5 + $0x1e8] sm:$0xff]
    %v446 = vld [vmem:[#allocation5 + $0x1f0] sm:$0xff]
    %v447 = vld [vmem:[#allocation5 + $0x1f8] sm:$0xff]
    %v448 = vld [vmem:[#allocation5 + $0x200] sm:$0xff]
    %v449 = vld [vmem:[#allocation5 + $0x208] sm:$0xff]
    %v450 = vld [vmem:[#allocation5 + $0x210] sm:$0xff]
    %v451 = vld [vmem:[#allocation5 + $0x218] sm:$0xff]
    %v452 = vld [vmem:[#allocation5 + $0x220] sm:$0xff]
    %v453 = vld [vmem:[#allocation5 + $0x228] sm:$0xff]
    %v454 = vld [vmem:[#allocation5 + $0x230] sm:$0xff]
    %v455 = vld [vmem:[#allocation5 + $0x238] sm:$0xff]
    %v456 = vld [vmem:[#allocation5 + $0x240] sm:$0xff]
    %v457 = vld [vmem:[#allocation5 + $0x248] sm:$0xff]
    %v458 = vld [vmem:[#allocation5 + $0x250] sm:$0xff]
    %v459 = vld [vmem:[#allocation5 + $0x258] sm:$0xff]
    %v460 = vld [vmem:[#allocation5 + $0x260] sm:$0xff]
    %v461 = vld [vmem:[#allocation5 + $0x268] sm:$0xff]
    %v462 = vld [vmem:[#allocation5 + $0x270] sm:$0xff]
    %v463 = vld [vmem:[#allocation5 + $0x278] sm:$0xff]
    %v464 = vld [vmem:[#allocation5 + $0x280] sm:$0xff]
    %v465 = vld [vmem:[#allocation5 + $0x288] sm:$0xff]
    %v466 = vld [vmem:[#allocation5 + $0x290] sm:$0xff]
    %v467 = vld [vmem:[#allocation5 + $0x298] sm:$0xff]
    %v468 = vld [vmem:[#allocation5 + $0x2a0] sm:$0xff]
    %v469 = vld [vmem:[#allocation5 + $0x2a8] sm:$0xff]
    %v470 = vld [vmem:[#allocation5 + $0x2b0] sm:$0xff]
    %v471 = vld [vmem:[#allocation5 + $0x2b8] sm:$0xff]
    %v472 = vld [vmem:[#allocation5 + $0x2c0] sm:$0xff]
    %v473 = vld [vmem:[#allocation5 + $0x2c8] sm:$0xff]
    %v474 = vld [vmem:[#allocation5 + $0x2d0] sm:$0xff]
    %v475 = vld [vmem:[#allocation5 + $0x2d8] sm:$0xff]
    %v476 = vld [vmem:[#allocation5 + $0x2e0] sm:$0xff]
    %v477 = vld [vmem:[#allocation5 + $0x2e8] sm:$0xff]
    %v478 = vld [vmem:[#allocation5 + $0x2f0] sm:$0xff]
    %v479 = vld [vmem:[#allocation5 + $0x2f8] sm:$0xff]
    %v480 = vld [vmem:[#allocation5 + $0x300] sm:$0xff]
    %v481 = vld [vmem:[#allocation5 + $0x308] sm:$0xff]
    %v482 = vld [vmem:[#allocation5 + $0x310] sm:$0xff]
    %v483 = vld [vmem:[#allocation5 + $0x318] sm:$0xff]
    %v484 = vld [vmem:[#allocation5 + $0x320] sm:$0xff]
    %v485 = vld [vmem:[#allocation5 + $0x328] sm:$0xff]
    %v486 = vld [vmem:[#allocation5 + $0x330] sm:$0xff]
    %v487 = vld [vmem:[#allocation5 + $0x338] sm:$0xff]
    %v488 = vld [vmem:[#allocation5 + $0x340] sm:$0xff]
    %v489 = vld [vmem:[#allocation5 + $0x348] sm:$0xff]
    %v490 = vld [vmem:[#allocation5 + $0x350] sm:$0xff]
    %v491 = vld [vmem:[#allocation5 + $0x358] sm:$0xff]
    %v492 = vld [vmem:[#allocation5 + $0x360] sm:$0xff]
    %v493 = vld [vmem:[#allocation5 + $0x368] sm:$0xff]
    %v494 = vld [vmem:[#allocation5 + $0x370] sm:$0xff]
    %v495 = vld [vmem:[#allocation5 + $0x378] sm:$0xff]
    %v496 = vld [vmem:[#allocation5 + $0x380] sm:$0xff]
    %v497 = vld [vmem:[#allocation5 + $0x388] sm:$0xff]
    %v498 = vld [vmem:[#allocation5 + $0x390] sm:$0xff]
    %v499 = vld [vmem:[#allocation5 + $0x398] sm:$0xff]
    %v500 = vld [vmem:[#allocation5 + $0x3a0] sm:$0xff]
    %v501 = vld [vmem:[#allocation5 + $0x3a8] sm:$0xff]
    %v502 = vld [vmem:[#allocation5 + $0x3b0] sm:$0xff]
    %v503 = vld [vmem:[#allocation5 + $0x3b8] sm:$0xff]
    %v504 = vld [vmem:[#allocation5 + $0x3c0] sm:$0xff]
    %v505 = vld [vmem:[#allocation5 + $0x3c8] sm:$0xff]
    %v506 = vld [vmem:[#allocation5 + $0x3d0] sm:$0xff]
    %v507 = vld [vmem:[#allocation5 + $0x3d8] sm:$0xff]
    %v508 = vld [vmem:[#allocation5 + $0x3e0] sm:$0xff]
    %v509 = vld [vmem:[#allocation5 + $0x3e8] sm:$0xff]
    %v510 = vld [vmem:[#allocation5 + $0x3f0] sm:$0xff]
    %v511 = vld [vmem:[#allocation5 + $0x3f8] sm:$0xff]
    %v512 = vld [vmem:[#allocation5 + $0x400] sm:$0xff]
    %v513 = vld [vmem:[#allocation5 + $0x408] sm:$0xff]
    %v514 = vld [vmem:[#allocation5 + $0x410] sm:$0xff]
    %v515 = vld [vmem:[#allocation5 + $0x418] sm:$0xff]
    %v516 = vld [vmem:[#allocation5 + $0x420] sm:$0xff]
    %v517 = vld [vmem:[#allocation5 + $0x428] sm:$0xff]
    %v518 = vld [vmem:[#allocation5 + $0x430] sm:$0xff]
    %v519 = vld [vmem:[#allocation5 + $0x438] sm:$0xff]
    %v520 = vld [vmem:[#allocation5 + $0x440] sm:$0xff]
    %v521 = vld [vmem:[#allocation5 + $0x448] sm:$0xff]
    %v522 = vld [vmem:[#allocation5 + $0x450] sm:$0xff]
    %v523 = vld [vmem:[#allocation5 + $0x458] sm:$0xff]
    %v524 = vld [vmem:[#allocation5 + $0x460] sm:$0xff]
    %v525 = vld [vmem:[#allocation5 + $0x468] sm:$0xff]
    %v526 = vld [vmem:[#allocation5 + $0x470] sm:$0xff]
    %v527 = vld [vmem:[#allocation5 + $0x478] sm:$0xff]
    %v528 = vld [vmem:[#allocation5 + $0x480] sm:$0xff]
    %v529 = vld [vmem:[#allocation5 + $0x488] sm:$0xff]
    %v530 = vld [vmem:[#allocation5 + $0x490] sm:$0xff]
    %v531 = vld [vmem:[#allocation5 + $0x498] sm:$0xff]
    %v532 = vld [vmem:[#allocation5 + $0x4a0] sm:$0xff]
    %v533 = vld [vmem:[#allocation5 + $0x4a8] sm:$0xff]
    %v534 = vld [vmem:[#allocation5 + $0x4b0] sm:$0xff]
    %v535 = vld [vmem:[#allocation5 + $0x4b8] sm:$0xff]
    %v536 = vld [vmem:[#allocation5 + $0x4c0] sm:$0xff]
    %v537 = vld [vmem:[#allocation5 + $0x4c8] sm:$0xff]
    %v538 = vld [vmem:[#allocation5 + $0x4d0] sm:$0xff]
    %v539 = vld [vmem:[#allocation5 + $0x4d8] sm:$0xff]
    %v540 = vld [vmem:[#allocation5 + $0x4e0] sm:$0xff]
    %v541 = vld [vmem:[#allocation5 + $0x4e8] sm:$0xff]
    %v542 = vld [vmem:[#allocation5 + $0x4f0] sm:$0xff]
    %v543 = vld [vmem:[#allocation5 + $0x4f8] sm:$0xff]
    %v544 = vld [vmem:[#allocation5 + $0x500] sm:$0xff]
    %v545 = vld [vmem:[#allocation5 + $0x508] sm:$0xff]
    %v546 = vld [vmem:[#allocation5 + $0x510] sm:$0xff]
    %v547 = vld [vmem:[#allocation5 + $0x518] sm:$0xff]
    %v548 = vld [vmem:[#allocation5 + $0x520] sm:$0xff]
    %v549 = vld [vmem:[#allocation5 + $0x528] sm:$0xff]
    %v550 = vld [vmem:[#allocation5 + $0x530] sm:$0xff]
    %v551 = vld [vmem:[#allocation5 + $0x538] sm:$0xff]
    %v552 = vld [vmem:[#allocation5 + $0x540] sm:$0xff]
    %v553 = vld [vmem:[#allocation5 + $0x548] sm:$0xff]
    %v554 = vld [vmem:[#allocation5 + $0x550] sm:$0xff]
    %v555 = vld [vmem:[#allocation5 + $0x558] sm:$0xff]
    %v556 = vld [vmem:[#allocation5 + $0x560] sm:$0xff]
    %v557 = vld [vmem:[#allocation5 + $0x568] sm:$0xff]
    %v558 = vld [vmem:[#allocation5 + $0x570] sm:$0xff]
    %v559 = vld [vmem:[#allocation5 + $0x578] sm:$0xff]
    %v560 = vld [vmem:[#allocation5 + $0x580] sm:$0xff]
    %v561 = vld [vmem:[#allocation5 + $0x588] sm:$0xff]
    %v562 = vld [vmem:[#allocation5 + $0x590] sm:$0xff]
    %v563 = vld [vmem:[#allocation5 + $0x598] sm:$0xff]
    %v564 = vld [vmem:[#allocation5 + $0x5a0] sm:$0xff]
    %v565 = vld [vmem:[#allocation5 + $0x5a8] sm:$0xff]
    %v566 = vld [vmem:[#allocation5 + $0x5b0] sm:$0xff]
    %v567 = vld [vmem:[#allocation5 + $0x5b8] sm:$0xff]
    %v568 = vld [vmem:[#allocation5 + $0x5c0] sm:$0xff]
    %v569 = vld [vmem:[#allocation5 + $0x5c8] sm:$0xff]
    %v570 = vld [vmem:[#allocation5 + $0x5d0] sm:$0xff]
    %v571 = vld [vmem:[#allocation5 + $0x5d8] sm:$0xff]
    %v572 = vld [vmem:[#allocation5 + $0x5e0] sm:$0xff]
    %v573 = vld [vmem:[#allocation5 + $0x5e8] sm:$0xff]
    %v574 = vld [vmem:[#allocation5 + $0x5f0] sm:$0xff]
    %v575 = vld [vmem:[#allocation5 + $0x5f8] sm:$0xff]
    %v576 = vld [vmem:[#allocation5 + $0x600] sm:$0xff]
    %v577 = vld [vmem:[#allocation5 + $0x608] sm:$0xff]
    %v578 = vld [vmem:[#allocation5 + $0x610] sm:$0xff]
    %v579 = vld [vmem:[#allocation5 + $0x618] sm:$0xff]
    %v580 = vld [vmem:[#allocation5 + $0x620] sm:$0xff]
    %v581 = vld [vmem:[#allocation5 + $0x628] sm:$0xff]
    %v582 = vld [vmem:[#allocation5 + $0x630] sm:$0xff]
    %v583 = vld [vmem:[#allocation5 + $0x638] sm:$0xff]
    %v584 = vld [vmem:[#allocation5 + $0x640] sm:$0xff]
    %v585 = vld [vmem:[#allocation5 + $0x648] sm:$0xff]
    %v586 = vld [vmem:[#allocation5 + $0x650] sm:$0xff]
    %v587 = vld [vmem:[#allocation5 + $0x658] sm:$0xff]
    %v588 = vld [vmem:[#allocation5 + $0x660] sm:$0xff]
    %v589 = vld [vmem:[#allocation5 + $0x668] sm:$0xff]
    %v590 = vld [vmem:[#allocation5 + $0x670] sm:$0xff]
    %v591 = vld [vmem:[#allocation5 + $0x678] sm:$0xff]
    %v592 = vld [vmem:[#allocation5 + $0x680] sm:$0xff]
    %v593 = vld [vmem:[#allocation5 + $0x688] sm:$0xff]
    %v594 = vld [vmem:[#allocation5 + $0x690] sm:$0xff]
    %v595 = vld [vmem:[#allocation5 + $0x698] sm:$0xff]
    %v596 = vld [vmem:[#allocation5 + $0x6a0] sm:$0xff]
    %v597 = vld [vmem:[#allocation5 + $0x6a8] sm:$0xff]
    %v598 = vld [vmem:[#allocation5 + $0x6b0] sm:$0xff]
    %v599 = vld [vmem:[#allocation5 + $0x6b8] sm:$0xff]
    %v600 = vld [vmem:[#allocation5 + $0x6c0] sm:$0xff]
    %v601 = vld [vmem:[#allocation5 + $0x6c8] sm:$0xff]
    %v602 = vld [vmem:[#allocation5 + $0x6d0] sm:$0xff]
    %v603 = vld [vmem:[#allocation5 + $0x6d8] sm:$0xff]
    %v604 = vld [vmem:[#allocation5 + $0x6e0] sm:$0xff]
    %v605 = vld [vmem:[#allocation5 + $0x6e8] sm:$0xff]
    %v606 = vld [vmem:[#allocation5 + $0x6f0] sm:$0xff]
    %v607 = vld [vmem:[#allocation5 + $0x6f8] sm:$0xff]
    %v608 = vld [vmem:[#allocation5 + $0x700] sm:$0xff]
    %v609 = vld [vmem:[#allocation5 + $0x708] sm:$0xff]
    %v610 = vld [vmem:[#allocation5 + $0x710] sm:$0xff]
    %v611 = vld [vmem:[#allocation5 + $0x718] sm:$0xff]
    %v612 = vld [vmem:[#allocation5 + $0x720] sm:$0xff]
    %v613 = vld [vmem:[#allocation5 + $0x728] sm:$0xff]
    %v614 = vld [vmem:[#allocation5 + $0x730] sm:$0xff]
    %v615 = vld [vmem:[#allocation5 + $0x738] sm:$0xff]
    %v616 = vld [vmem:[#allocation5 + $0x740] sm:$0xff]
    %v617 = vld [vmem:[#allocation5 + $0x748] sm:$0xff]
    %v618 = vld [vmem:[#allocation5 + $0x750] sm:$0xff]
    %v619 = vld [vmem:[#allocation5 + $0x758] sm:$0xff]
    %v620 = vld [vmem:[#allocation5 + $0x760] sm:$0xff]
    %v621 = vld [vmem:[#allocation5 + $0x768] sm:$0xff]
    %v622 = vld [vmem:[#allocation5 + $0x770] sm:$0xff]
    %v623 = vld [vmem:[#allocation5 + $0x778] sm:$0xff]
    %v624 = vld [vmem:[#allocation5 + $0x780] sm:$0xff]
    %v625 = vld [vmem:[#allocation5 + $0x788] sm:$0xff]
    %v626 = vld [vmem:[#allocation5 + $0x790] sm:$0xff]
    %v627 = vld [vmem:[#allocation5 + $0x798] sm:$0xff]
    %v628 = vld [vmem:[#allocation5 + $0x7a0] sm:$0xff]
    %v629 = vld [vmem:[#allocation5 + $0x7a8] sm:$0xff]
    %v630 = vld [vmem:[#allocation5 + $0x7b0] sm:$0xff]
    %v631 = vld [vmem:[#allocation5 + $0x7b8] sm:$0xff]
    %v632 = vld [vmem:[#allocation5 + $0x7c0] sm:$0xff]
    %v633 = vld [vmem:[#allocation5 + $0x7c8] sm:$0xff]
    %v634 = vld [vmem:[#allocation5 + $0x7d0] sm:$0xff]
    %v635 = vld [vmem:[#allocation5 + $0x7d8] sm:$0xff]
    %v636 = vld [vmem:[#allocation5 + $0x7e0] sm:$0xff]
    %v637 = vld [vmem:[#allocation5 + $0x7e8] sm:$0xff]
    %v638 = vld [vmem:[#allocation5 + $0x7f0] sm:$0xff]
    %v639 = vld [vmem:[#allocation5 + $0x7f8] sm:$0xff]
    %v640 = vld [vmem:[%s5] sm:$0xf]
    %v642 = vlaneseq
    %v643 = vshrl.u32 %v642, 7
    %v644 = vsub.s32 0, %v643
    %v645 = vrot.slane %v640, %v644
    %v646 = vlaneseq
    %v647 = vshrl.u32 %v646, 7
    %v648 = vsub.s32 1, %v647
    %v649 = vrot.slane %v640, %v648
    %v650 = vlaneseq
    %v651 = vshrl.u32 %v650, 7
    %v652 = vsub.s32 2, %v651
    %v653 = vrot.slane %v640, %v652
    %v654 = vlaneseq
    %v655 = vshrl.u32 %v654, 7
    %v656 = vsub.s32 3, %v655
    %v657 = vrot.slane %v640, %v656
    %v918 = vunpack.c.l.b16 %v384
    %v919 = vunpack.c.h.b16 %v384
    %v920 = vunpack.c.l.b16 %v385
    %v921 = vunpack.c.h.b16 %v385
    %v922 = vunpack.c.l.b16 %v386
    %v923 = vunpack.c.h.b16 %v386
    %v924 = vunpack.c.l.b16 %v387
    %v925 = vunpack.c.h.b16 %v387
    %v926 = vunpack.c.l.b16 %v388
    %v927 = vunpack.c.h.b16 %v388
    %v928 = vunpack.c.l.b16 %v389
    %v929 = vunpack.c.h.b16 %v389
    %v930 = vunpack.c.l.b16 %v390
    %v931 = vunpack.c.h.b16 %v390
    %v932 = vunpack.c.l.b16 %v391
    %v933 = vunpack.c.h.b16 %v391
    %v934 = vunpack.c.l.b16 %v392
    %v935 = vunpack.c.h.b16 %v392
    %v936 = vunpack.c.l.b16 %v393
    %v937 = vunpack.c.h.b16 %v393
    %v938 = vunpack.c.l.b16 %v394
    %v939 = vunpack.c.h.b16 %v394
    %v940 = vunpack.c.l.b16 %v395
    %v941 = vunpack.c.h.b16 %v395
    %v942 = vunpack.c.l.b16 %v396
    %v943 = vunpack.c.h.b16 %v396
    %v944 = vunpack.c.l.b16 %v397
    %v945 = vunpack.c.h.b16 %v397
    %v946 = vunpack.c.l.b16 %v398
    %v947 = vunpack.c.h.b16 %v398
    %v948 = vunpack.c.l.b16 %v399
    %v949 = vunpack.c.h.b16 %v399
    %v950 = vunpack.c.l.b16 %v400
    %v951 = vunpack.c.h.b16 %v400
    %v952 = vunpack.c.l.b16 %v401
    %v953 = vunpack.c.h.b16 %v401
    %v954 = vunpack.c.l.b16 %v402
    %v955 = vunpack.c.h.b16 %v402
    %v956 = vunpack.c.l.b16 %v403
    %v957 = vunpack.c.h.b16 %v403
    %v958 = vunpack.c.l.b16 %v404
    %v959 = vunpack.c.h.b16 %v404
    %v960 = vunpack.c.l.b16 %v405
    %v961 = vunpack.c.h.b16 %v405
    %v962 = vunpack.c.l.b16 %v406
    %v963 = vunpack.c.h.b16 %v406
    %v964 = vunpack.c.l.b16 %v407
    %v965 = vunpack.c.h.b16 %v407
    %v966 = vunpack.c.l.b16 %v408
    %v967 = vunpack.c.h.b16 %v408
    %v968 = vunpack.c.l.b16 %v409
    %v969 = vunpack.c.h.b16 %v409
    %v970 = vunpack.c.l.b16 %v410
    %v971 = vunpack.c.h.b16 %v410
    %v972 = vunpack.c.l.b16 %v411
    %v973 = vunpack.c.h.b16 %v411
    %v974 = vunpack.c.l.b16 %v412
    %v975 = vunpack.c.h.b16 %v412
    %v976 = vunpack.c.l.b16 %v413
    %v977 = vunpack.c.h.b16 %v413
    %v978 = vunpack.c.l.b16 %v414
    %v979 = vunpack.c.h.b16 %v414
    %v980 = vunpack.c.l.b16 %v415
    %v981 = vunpack.c.h.b16 %v415
    %v982 = vunpack.c.l.b16 %v416
    %v983 = vunpack.c.h.b16 %v416
    %v984 = vunpack.c.l.b16 %v417
    %v985 = vunpack.c.h.b16 %v417
    %v986 = vunpack.c.l.b16 %v418
    %v987 = vunpack.c.h.b16 %v418
    %v988 = vunpack.c.l.b16 %v419
    %v989 = vunpack.c.h.b16 %v419
    %v990 = vunpack.c.l.b16 %v420
    %v991 = vunpack.c.h.b16 %v420
    %v992 = vunpack.c.l.b16 %v421
    %v993 = vunpack.c.h.b16 %v421
    %v994 = vunpack.c.l.b16 %v422
    %v995 = vunpack.c.h.b16 %v422
    %v996 = vunpack.c.l.b16 %v423
    %v997 = vunpack.c.h.b16 %v423
    %v998 = vunpack.c.l.b16 %v424
    %v999 = vunpack.c.h.b16 %v424
    %v1000 = vunpack.c.l.b16 %v425
    %v1001 = vunpack.c.h.b16 %v425
    %v1002 = vunpack.c.l.b16 %v426
    %v1003 = vunpack.c.h.b16 %v426
    %v1004 = vunpack.c.l.b16 %v427
    %v1005 = vunpack.c.h.b16 %v427
    %v1006 = vunpack.c.l.b16 %v428
    %v1007 = vunpack.c.h.b16 %v428
    %v1008 = vunpack.c.l.b16 %v429
    %v1009 = vunpack.c.h.b16 %v429
    %v1010 = vunpack.c.l.b16 %v430
    %v1011 = vunpack.c.h.b16 %v430
    %v1012 = vunpack.c.l.b16 %v431
    %v1013 = vunpack.c.h.b16 %v431
    %v1014 = vunpack.c.l.b16 %v432
    %v1015 = vunpack.c.h.b16 %v432
    %v1016 = vunpack.c.l.b16 %v433
    %v1017 = vunpack.c.h.b16 %v433
    %v1018 = vunpack.c.l.b16 %v434
    %v1019 = vunpack.c.h.b16 %v434
    %v1020 = vunpack.c.l.b16 %v435
    %v1021 = vunpack.c.h.b16 %v435
    %v1022 = vunpack.c.l.b16 %v436
    %v1023 = vunpack.c.h.b16 %v436
    %v1024 = vunpack.c.l.b16 %v437
    %v1025 = vunpack.c.h.b16 %v437
    %v1026 = vunpack.c.l.b16 %v438
    %v1027 = vunpack.c.h.b16 %v438
    %v1028 = vunpack.c.l.b16 %v439
    %v1029 = vunpack.c.h.b16 %v439
    %v1030 = vunpack.c.l.b16 %v440
    %v1031 = vunpack.c.h.b16 %v440
    %v1032 = vunpack.c.l.b16 %v441
    %v1033 = vunpack.c.h.b16 %v441
    %v1034 = vunpack.c.l.b16 %v442
    %v1035 = vunpack.c.h.b16 %v442
    %v1036 = vunpack.c.l.b16 %v443
    %v1037 = vunpack.c.h.b16 %v443
    %v1038 = vunpack.c.l.b16 %v444
    %v1039 = vunpack.c.h.b16 %v444
    %v1040 = vunpack.c.l.b16 %v445
    %v1041 = vunpack.c.h.b16 %v445
    %v1042 = vunpack.c.l.b16 %v446
    %v1043 = vunpack.c.h.b16 %v446
    %v1044 = vunpack.c.l.b16 %v447
    %v1045 = vunpack.c.h.b16 %v447
    %v1046 = vunpack.c.l.b16 %v448
    %v1047 = vunpack.c.h.b16 %v448
    %v1048 = vunpack.c.l.b16 %v449
    %v1049 = vunpack.c.h.b16 %v449
    %v1050 = vunpack.c.l.b16 %v450
    %v1051 = vunpack.c.h.b16 %v450
    %v1052 = vunpack.c.l.b16 %v451
    %v1053 = vunpack.c.h.b16 %v451
    %v1054 = vunpack.c.l.b16 %v452
    %v1055 = vunpack.c.h.b16 %v452
    %v1056 = vunpack.c.l.b16 %v453
    %v1057 = vunpack.c.h.b16 %v453
    %v1058 = vunpack.c.l.b16 %v454
    %v1059 = vunpack.c.h.b16 %v454
    %v1060 = vunpack.c.l.b16 %v455
    %v1061 = vunpack.c.h.b16 %v455
    %v1062 = vunpack.c.l.b16 %v456
    %v1063 = vunpack.c.h.b16 %v456
    %v1064 = vunpack.c.l.b16 %v457
    %v1065 = vunpack.c.h.b16 %v457
    %v1066 = vunpack.c.l.b16 %v458
    %v1067 = vunpack.c.h.b16 %v458
    %v1068 = vunpack.c.l.b16 %v459
    %v1069 = vunpack.c.h.b16 %v459
    %v1070 = vunpack.c.l.b16 %v460
    %v1071 = vunpack.c.h.b16 %v460
    %v1072 = vunpack.c.l.b16 %v461
    %v1073 = vunpack.c.h.b16 %v461
    %v1074 = vunpack.c.l.b16 %v462
    %v1075 = vunpack.c.h.b16 %v462
    %v1076 = vunpack.c.l.b16 %v463
    %v1077 = vunpack.c.h.b16 %v463
    %v1078 = vunpack.c.l.b16 %v464
    %v1079 = vunpack.c.h.b16 %v464
    %v1080 = vunpack.c.l.b16 %v465
    %v1081 = vunpack.c.h.b16 %v465
    %v1082 = vunpack.c.l.b16 %v466
    %v1083 = vunpack.c.h.b16 %v466
    %v1084 = vunpack.c.l.b16 %v467
    %v1085 = vunpack.c.h.b16 %v467
    %v1086 = vunpack.c.l.b16 %v468
    %v1087 = vunpack.c.h.b16 %v468
    %v1088 = vunpack.c.l.b16 %v469
    %v1089 = vunpack.c.h.b16 %v469
    %v1090 = vunpack.c.l.b16 %v470
    %v1091 = vunpack.c.h.b16 %v470
    %v1092 = vunpack.c.l.b16 %v471
    %v1093 = vunpack.c.h.b16 %v471
    %v1094 = vunpack.c.l.b16 %v472
    %v1095 = vunpack.c.h.b16 %v472
    %v1096 = vunpack.c.l.b16 %v473
    %v1097 = vunpack.c.h.b16 %v473
    %v1098 = vunpack.c.l.b16 %v474
    %v1099 = vunpack.c.h.b16 %v474
    %v1100 = vunpack.c.l.b16 %v475
    %v1101 = vunpack.c.h.b16 %v475
    %v1102 = vunpack.c.l.b16 %v476
    %v1103 = vunpack.c.h.b16 %v476
    %v1104 = vunpack.c.l.b16 %v477
    %v1105 = vunpack.c.h.b16 %v477
    %v1106 = vunpack.c.l.b16 %v478
    %v1107 = vunpack.c.h.b16 %v478
    %v1108 = vunpack.c.l.b16 %v479
    %v1109 = vunpack.c.h.b16 %v479
    %v1110 = vunpack.c.l.b16 %v480
    %v1111 = vunpack.c.h.b16 %v480
    %v1112 = vunpack.c.l.b16 %v481
    %v1113 = vunpack.c.h.b16 %v481
    %v1114 = vunpack.c.l.b16 %v482
    %v1115 = vunpack.c.h.b16 %v482
    %v1116 = vunpack.c.l.b16 %v483
    %v1117 = vunpack.c.h.b16 %v483
    %v1118 = vunpack.c.l.b16 %v484
    %v1119 = vunpack.c.h.b16 %v484
    %v1120 = vunpack.c.l.b16 %v485
    %v1121 = vunpack.c.h.b16 %v485
    %v1122 = vunpack.c.l.b16 %v486
    %v1123 = vunpack.c.h.b16 %v486
    %v1124 = vunpack.c.l.b16 %v487
    %v1125 = vunpack.c.h.b16 %v487
    %v1126 = vunpack.c.l.b16 %v488
    %v1127 = vunpack.c.h.b16 %v488
    %v1128 = vunpack.c.l.b16 %v489
    %v1129 = vunpack.c.h.b16 %v489
    %v1130 = vunpack.c.l.b16 %v490
    %v1131 = vunpack.c.h.b16 %v490
    %v1132 = vunpack.c.l.b16 %v491
    %v1133 = vunpack.c.h.b16 %v491
    %v1134 = vunpack.c.l.b16 %v492
    %v1135 = vunpack.c.h.b16 %v492
    %v1136 = vunpack.c.l.b16 %v493
    %v1137 = vunpack.c.h.b16 %v493
    %v1138 = vunpack.c.l.b16 %v494
    %v1139 = vunpack.c.h.b16 %v494
    %v1140 = vunpack.c.l.b16 %v495
    %v1141 = vunpack.c.h.b16 %v495
    %v1142 = vunpack.c.l.b16 %v496
    %v1143 = vunpack.c.h.b16 %v496
    %v1144 = vunpack.c.l.b16 %v497
    %v1145 = vunpack.c.h.b16 %v497
    %v1146 = vunpack.c.l.b16 %v498
    %v1147 = vunpack.c.h.b16 %v498
    %v1148 = vunpack.c.l.b16 %v499
    %v1149 = vunpack.c.h.b16 %v499
    %v1150 = vunpack.c.l.b16 %v500
    %v1151 = vunpack.c.h.b16 %v500
    %v1152 = vunpack.c.l.b16 %v501
    %v1153 = vunpack.c.h.b16 %v501
    %v1154 = vunpack.c.l.b16 %v502
    %v1155 = vunpack.c.h.b16 %v502
    %v1156 = vunpack.c.l.b16 %v503
    %v1157 = vunpack.c.h.b16 %v503
    %v1158 = vunpack.c.l.b16 %v504
    %v1159 = vunpack.c.h.b16 %v504
    %v1160 = vunpack.c.l.b16 %v505
    %v1161 = vunpack.c.h.b16 %v505
    %v1162 = vunpack.c.l.b16 %v506
    %v1163 = vunpack.c.h.b16 %v506
    %v1164 = vunpack.c.l.b16 %v507
    %v1165 = vunpack.c.h.b16 %v507
    %v1166 = vunpack.c.l.b16 %v508
    %v1167 = vunpack.c.h.b16 %v508
    %v1168 = vunpack.c.l.b16 %v509
    %v1169 = vunpack.c.h.b16 %v509
    %v1170 = vunpack.c.l.b16 %v510
    %v1171 = vunpack.c.h.b16 %v510
    %v1172 = vunpack.c.l.b16 %v511
    %v1173 = vunpack.c.h.b16 %v511
    %v1174 = vunpack.c.l.b16 %v512
    %v1175 = vunpack.c.h.b16 %v512
    %v1176 = vunpack.c.l.b16 %v513
    %v1177 = vunpack.c.h.b16 %v513
    %v1178 = vunpack.c.l.b16 %v514
    %v1179 = vunpack.c.h.b16 %v514
    %v1180 = vunpack.c.l.b16 %v515
    %v1181 = vunpack.c.h.b16 %v515
    %v1182 = vunpack.c.l.b16 %v516
    %v1183 = vunpack.c.h.b16 %v516
    %v1184 = vunpack.c.l.b16 %v517
    %v1185 = vunpack.c.h.b16 %v517
    %v1186 = vunpack.c.l.b16 %v518
    %v1187 = vunpack.c.h.b16 %v518
    %v1188 = vunpack.c.l.b16 %v519
    %v1189 = vunpack.c.h.b16 %v519
    %v1190 = vunpack.c.l.b16 %v520
    %v1191 = vunpack.c.h.b16 %v520
    %v1192 = vunpack.c.l.b16 %v521
    %v1193 = vunpack.c.h.b16 %v521
    %v1194 = vunpack.c.l.b16 %v522
    %v1195 = vunpack.c.h.b16 %v522
    %v1196 = vunpack.c.l.b16 %v523
    %v1197 = vunpack.c.h.b16 %v523
    %v1198 = vunpack.c.l.b16 %v524
    %v1199 = vunpack.c.h.b16 %v524
    %v1200 = vunpack.c.l.b16 %v525
    %v1201 = vunpack.c.h.b16 %v525
    %v1202 = vunpack.c.l.b16 %v526
    %v1203 = vunpack.c.h.b16 %v526
    %v1204 = vunpack.c.l.b16 %v527
    %v1205 = vunpack.c.h.b16 %v527
    %v1206 = vunpack.c.l.b16 %v528
    %v1207 = vunpack.c.h.b16 %v528
    %v1208 = vunpack.c.l.b16 %v529
    %v1209 = vunpack.c.h.b16 %v529
    %v1210 = vunpack.c.l.b16 %v530
    %v1211 = vunpack.c.h.b16 %v530
    %v1212 = vunpack.c.l.b16 %v531
    %v1213 = vunpack.c.h.b16 %v531
    %v1214 = vunpack.c.l.b16 %v532
    %v1215 = vunpack.c.h.b16 %v532
    %v1216 = vunpack.c.l.b16 %v533
    %v1217 = vunpack.c.h.b16 %v533
    %v1218 = vunpack.c.l.b16 %v534
    %v1219 = vunpack.c.h.b16 %v534
    %v1220 = vunpack.c.l.b16 %v535
    %v1221 = vunpack.c.h.b16 %v535
    %v1222 = vunpack.c.l.b16 %v536
    %v1223 = vunpack.c.h.b16 %v536
    %v1224 = vunpack.c.l.b16 %v537
    %v1225 = vunpack.c.h.b16 %v537
    %v1226 = vunpack.c.l.b16 %v538
    %v1227 = vunpack.c.h.b16 %v538
    %v1228 = vunpack.c.l.b16 %v539
    %v1229 = vunpack.c.h.b16 %v539
    %v1230 = vunpack.c.l.b16 %v540
    %v1231 = vunpack.c.h.b16 %v540
    %v1232 = vunpack.c.l.b16 %v541
    %v1233 = vunpack.c.h.b16 %v541
    %v1234 = vunpack.c.l.b16 %v542
    %v1235 = vunpack.c.h.b16 %v542
    %v1236 = vunpack.c.l.b16 %v543
    %v1237 = vunpack.c.h.b16 %v543
    %v1238 = vunpack.c.l.b16 %v544
    %v1239 = vunpack.c.h.b16 %v544
    %v1240 = vunpack.c.l.b16 %v545
    %v1241 = vunpack.c.h.b16 %v545
    %v1242 = vunpack.c.l.b16 %v546
    %v1243 = vunpack.c.h.b16 %v546
    %v1244 = vunpack.c.l.b16 %v547
    %v1245 = vunpack.c.h.b16 %v547
    %v1246 = vunpack.c.l.b16 %v548
    %v1247 = vunpack.c.h.b16 %v548
    %v1248 = vunpack.c.l.b16 %v549
    %v1249 = vunpack.c.h.b16 %v549
    %v1250 = vunpack.c.l.b16 %v550
    %v1251 = vunpack.c.h.b16 %v550
    %v1252 = vunpack.c.l.b16 %v551
    %v1253 = vunpack.c.h.b16 %v551
    %v1254 = vunpack.c.l.b16 %v552
    %v1255 = vunpack.c.h.b16 %v552
    %v1256 = vunpack.c.l.b16 %v553
    %v1257 = vunpack.c.h.b16 %v553
    %v1258 = vunpack.c.l.b16 %v554
    %v1259 = vunpack.c.h.b16 %v554
    %v1260 = vunpack.c.l.b16 %v555
    %v1261 = vunpack.c.h.b16 %v555
    %v1262 = vunpack.c.l.b16 %v556
    %v1263 = vunpack.c.h.b16 %v556
    %v1264 = vunpack.c.l.b16 %v557
    %v1265 = vunpack.c.h.b16 %v557
    %v1266 = vunpack.c.l.b16 %v558
    %v1267 = vunpack.c.h.b16 %v558
    %v1268 = vunpack.c.l.b16 %v559
    %v1269 = vunpack.c.h.b16 %v559
    %v1270 = vunpack.c.l.b16 %v560
    %v1271 = vunpack.c.h.b16 %v560
    %v1272 = vunpack.c.l.b16 %v561
    %v1273 = vunpack.c.h.b16 %v561
    %v1274 = vunpack.c.l.b16 %v562
    %v1275 = vunpack.c.h.b16 %v562
    %v1276 = vunpack.c.l.b16 %v563
    %v1277 = vunpack.c.h.b16 %v563
    %v1278 = vunpack.c.l.b16 %v564
    %v1279 = vunpack.c.h.b16 %v564
    %v1280 = vunpack.c.l.b16 %v565
    %v1281 = vunpack.c.h.b16 %v565
    %v1282 = vunpack.c.l.b16 %v566
    %v1283 = vunpack.c.h.b16 %v566
    %v1284 = vunpack.c.l.b16 %v567
    %v1285 = vunpack.c.h.b16 %v567
    %v1286 = vunpack.c.l.b16 %v568
    %v1287 = vunpack.c.h.b16 %v568
    %v1288 = vunpack.c.l.b16 %v569
    %v1289 = vunpack.c.h.b16 %v569
    %v1290 = vunpack.c.l.b16 %v570
    %v1291 = vunpack.c.h.b16 %v570
    %v1292 = vunpack.c.l.b16 %v571
    %v1293 = vunpack.c.h.b16 %v571
    %v1294 = vunpack.c.l.b16 %v572
    %v1295 = vunpack.c.h.b16 %v572
    %v1296 = vunpack.c.l.b16 %v573
    %v1297 = vunpack.c.h.b16 %v573
    %v1298 = vunpack.c.l.b16 %v574
    %v1299 = vunpack.c.h.b16 %v574
    %v1300 = vunpack.c.l.b16 %v575
    %v1301 = vunpack.c.h.b16 %v575
    %v1302 = vunpack.c.l.b16 %v576
    %v1303 = vunpack.c.h.b16 %v576
    %v1304 = vunpack.c.l.b16 %v577
    %v1305 = vunpack.c.h.b16 %v577
    %v1306 = vunpack.c.l.b16 %v578
    %v1307 = vunpack.c.h.b16 %v578
    %v1308 = vunpack.c.l.b16 %v579
    %v1309 = vunpack.c.h.b16 %v579
    %v1310 = vunpack.c.l.b16 %v580
    %v1311 = vunpack.c.h.b16 %v580
    %v1312 = vunpack.c.l.b16 %v581
    %v1313 = vunpack.c.h.b16 %v581
    %v1314 = vunpack.c.l.b16 %v582
    %v1315 = vunpack.c.h.b16 %v582
    %v1316 = vunpack.c.l.b16 %v583
    %v1317 = vunpack.c.h.b16 %v583
    %v1318 = vunpack.c.l.b16 %v584
    %v1319 = vunpack.c.h.b16 %v584
    %v1320 = vunpack.c.l.b16 %v585
    %v1321 = vunpack.c.h.b16 %v585
    %v1322 = vunpack.c.l.b16 %v586
    %v1323 = vunpack.c.h.b16 %v586
    %v1324 = vunpack.c.l.b16 %v587
    %v1325 = vunpack.c.h.b16 %v587
    %v1326 = vunpack.c.l.b16 %v588
    %v1327 = vunpack.c.h.b16 %v588
    %v1328 = vunpack.c.l.b16 %v589
    %v1329 = vunpack.c.h.b16 %v589
    %v1330 = vunpack.c.l.b16 %v590
    %v1331 = vunpack.c.h.b16 %v590
    %v1332 = vunpack.c.l.b16 %v591
    %v1333 = vunpack.c.h.b16 %v591
    %v1334 = vunpack.c.l.b16 %v592
    %v1335 = vunpack.c.h.b16 %v592
    %v1336 = vunpack.c.l.b16 %v593
    %v1337 = vunpack.c.h.b16 %v593
    %v1338 = vunpack.c.l.b16 %v594
    %v1339 = vunpack.c.h.b16 %v594
    %v1340 = vunpack.c.l.b16 %v595
    %v1341 = vunpack.c.h.b16 %v595
    %v1342 = vunpack.c.l.b16 %v596
    %v1343 = vunpack.c.h.b16 %v596
    %v1344 = vunpack.c.l.b16 %v597
    %v1345 = vunpack.c.h.b16 %v597
    %v1346 = vunpack.c.l.b16 %v598
    %v1347 = vunpack.c.h.b16 %v598
    %v1348 = vunpack.c.l.b16 %v599
    %v1349 = vunpack.c.h.b16 %v599
    %v1350 = vunpack.c.l.b16 %v600
    %v1351 = vunpack.c.h.b16 %v600
    %v1352 = vunpack.c.l.b16 %v601
    %v1353 = vunpack.c.h.b16 %v601
    %v1354 = vunpack.c.l.b16 %v602
    %v1355 = vunpack.c.h.b16 %v602
    %v1356 = vunpack.c.l.b16 %v603
    %v1357 = vunpack.c.h.b16 %v603
    %v1358 = vunpack.c.l.b16 %v604
    %v1359 = vunpack.c.h.b16 %v604
    %v1360 = vunpack.c.l.b16 %v605
    %v1361 = vunpack.c.h.b16 %v605
    %v1362 = vunpack.c.l.b16 %v606
    %v1363 = vunpack.c.h.b16 %v606
    %v1364 = vunpack.c.l.b16 %v607
    %v1365 = vunpack.c.h.b16 %v607
    %v1366 = vunpack.c.l.b16 %v608
    %v1367 = vunpack.c.h.b16 %v608
    %v1368 = vunpack.c.l.b16 %v609
    %v1369 = vunpack.c.h.b16 %v609
    %v1370 = vunpack.c.l.b16 %v610
    %v1371 = vunpack.c.h.b16 %v610
    %v1372 = vunpack.c.l.b16 %v611
    %v1373 = vunpack.c.h.b16 %v611
    %v1374 = vunpack.c.l.b16 %v612
    %v1375 = vunpack.c.h.b16 %v612
    %v1376 = vunpack.c.l.b16 %v613
    %v1377 = vunpack.c.h.b16 %v613
    %v1378 = vunpack.c.l.b16 %v614
    %v1379 = vunpack.c.h.b16 %v614
    %v1380 = vunpack.c.l.b16 %v615
    %v1381 = vunpack.c.h.b16 %v615
    %v1382 = vunpack.c.l.b16 %v616
    %v1383 = vunpack.c.h.b16 %v616
    %v1384 = vunpack.c.l.b16 %v617
    %v1385 = vunpack.c.h.b16 %v617
    %v1386 = vunpack.c.l.b16 %v618
    %v1387 = vunpack.c.h.b16 %v618
    %v1388 = vunpack.c.l.b16 %v619
    %v1389 = vunpack.c.h.b16 %v619
    %v1390 = vunpack.c.l.b16 %v620
    %v1391 = vunpack.c.h.b16 %v620
    %v1392 = vunpack.c.l.b16 %v621
    %v1393 = vunpack.c.h.b16 %v621
    %v1394 = vunpack.c.l.b16 %v622
    %v1395 = vunpack.c.h.b16 %v622
    %v1396 = vunpack.c.l.b16 %v623
    %v1397 = vunpack.c.h.b16 %v623
    %v1398 = vunpack.c.l.b16 %v624
    %v1399 = vunpack.c.h.b16 %v624
    %v1400 = vunpack.c.l.b16 %v625
    %v1401 = vunpack.c.h.b16 %v625
    %v1402 = vunpack.c.l.b16 %v626
    %v1403 = vunpack.c.h.b16 %v626
    %v1404 = vunpack.c.l.b16 %v627
    %v1405 = vunpack.c.h.b16 %v627
    %v1406 = vunpack.c.l.b16 %v628
    %v1407 = vunpack.c.h.b16 %v628
    %v1408 = vunpack.c.l.b16 %v629
    %v1409 = vunpack.c.h.b16 %v629
    %v1410 = vunpack.c.l.b16 %v630
    %v1411 = vunpack.c.h.b16 %v630
    %v1412 = vunpack.c.l.b16 %v631
    %v1413 = vunpack.c.h.b16 %v631
    %v1414 = vunpack.c.l.b16 %v632
    %v1415 = vunpack.c.h.b16 %v632
    %v1416 = vunpack.c.l.b16 %v633
    %v1417 = vunpack.c.h.b16 %v633
    %v1418 = vunpack.c.l.b16 %v634
    %v1419 = vunpack.c.h.b16 %v634
    %v1420 = vunpack.c.l.b16 %v635
    %v1421 = vunpack.c.h.b16 %v635
    %v1422 = vunpack.c.l.b16 %v636
    %v1423 = vunpack.c.h.b16 %v636
    %v1424 = vunpack.c.l.b16 %v637
    %v1425 = vunpack.c.h.b16 %v637
    %v1426 = vunpack.c.l.b16 %v638
    %v1427 = vunpack.c.h.b16 %v638
    %v1428 = vunpack.c.l.b16 %v639
    %v1429 = vunpack.c.h.b16 %v639
    %v1430 = vpack.c.b16 %v922, %v918
    %v1431 = vpack.c.b16 %v923, %v919
    %v1432 = vpack.c.b16 %v924, %v920
    %v1433 = vpack.c.b16 %v925, %v921
    %v1434 = vpack.c.b16 %v930, %v926
    %v1435 = vpack.c.b16 %v931, %v927
    %v1436 = vpack.c.b16 %v932, %v928
    %v1437 = vpack.c.b16 %v933, %v929
    %v1438 = vpack.c.b16 %v938, %v934
    %v1439 = vpack.c.b16 %v939, %v935
    %v1440 = vpack.c.b16 %v940, %v936
    %v1441 = vpack.c.b16 %v941, %v937
    %v1442 = vpack.c.b16 %v946, %v942
    %v1443 = vpack.c.b16 %v947, %v943
    %v1444 = vpack.c.b16 %v948, %v944
    %v1445 = vpack.c.b16 %v949, %v945
    %v1446 = vpack.c.b16 %v954, %v950
    %v1447 = vpack.c.b16 %v955, %v951
    %v1448 = vpack.c.b16 %v956, %v952
    %v1449 = vpack.c.b16 %v957, %v953
    %v1450 = vpack.c.b16 %v962, %v958
    %v1451 = vpack.c.b16 %v963, %v959
    %v1452 = vpack.c.b16 %v964, %v960
    %v1453 = vpack.c.b16 %v965, %v961
    %v1454 = vpack.c.b16 %v970, %v966
    %v1455 = vpack.c.b16 %v971, %v967
    %v1456 = vpack.c.b16 %v972, %v968
    %v1457 = vpack.c.b16 %v973, %v969
    %v1458 = vpack.c.b16 %v978, %v974
    %v1459 = vpack.c.b16 %v979, %v975
    %v1460 = vpack.c.b16 %v980, %v976
    %v1461 = vpack.c.b16 %v981, %v977
    %v1462 = vpack.c.b16 %v986, %v982
    %v1463 = vpack.c.b16 %v987, %v983
    %v1464 = vpack.c.b16 %v988, %v984
    %v1465 = vpack.c.b16 %v989, %v985
    %v1466 = vpack.c.b16 %v994, %v990
    %v1467 = vpack.c.b16 %v995, %v991
    %v1468 = vpack.c.b16 %v996, %v992
    %v1469 = vpack.c.b16 %v997, %v993
    %v1470 = vpack.c.b16 %v1002, %v998
    %v1471 = vpack.c.b16 %v1003, %v999
    %v1472 = vpack.c.b16 %v1004, %v1000
    %v1473 = vpack.c.b16 %v1005, %v1001
    %v1474 = vpack.c.b16 %v1010, %v1006
    %v1475 = vpack.c.b16 %v1011, %v1007
    %v1476 = vpack.c.b16 %v1012, %v1008
    %v1477 = vpack.c.b16 %v1013, %v1009
    %v1478 = vpack.c.b16 %v1018, %v1014
    %v1479 = vpack.c.b16 %v1019, %v1015
    %v1480 = vpack.c.b16 %v1020, %v1016
    %v1481 = vpack.c.b16 %v1021, %v1017
    %v1482 = vpack.c.b16 %v1026, %v1022
    %v1483 = vpack.c.b16 %v1027, %v1023
    %v1484 = vpack.c.b16 %v1028, %v1024
    %v1485 = vpack.c.b16 %v1029, %v1025
    %v1486 = vpack.c.b16 %v1034, %v1030
    %v1487 = vpack.c.b16 %v1035, %v1031
    %v1488 = vpack.c.b16 %v1036, %v1032
    %v1489 = vpack.c.b16 %v1037, %v1033
    %v1490 = vpack.c.b16 %v1042, %v1038
    %v1491 = vpack.c.b16 %v1043, %v1039
    %v1492 = vpack.c.b16 %v1044, %v1040
    %v1493 = vpack.c.b16 %v1045, %v1041
    %v1494 = vpack.c.b16 %v1050, %v1046
    %v1495 = vpack.c.b16 %v1051, %v1047
    %v1496 = vpack.c.b16 %v1052, %v1048
    %v1497 = vpack.c.b16 %v1053, %v1049
    %v1498 = vpack.c.b16 %v1058, %v1054
    %v1499 = vpack.c.b16 %v1059, %v1055
    %v1500 = vpack.c.b16 %v1060, %v1056
    %v1501 = vpack.c.b16 %v1061, %v1057
    %v1502 = vpack.c.b16 %v1066, %v1062
    %v1503 = vpack.c.b16 %v1067, %v1063
    %v1504 = vpack.c.b16 %v1068, %v1064
    %v1505 = vpack.c.b16 %v1069, %v1065
    %v1506 = vpack.c.b16 %v1074, %v1070
    %v1507 = vpack.c.b16 %v1075, %v1071
    %v1508 = vpack.c.b16 %v1076, %v1072
    %v1509 = vpack.c.b16 %v1077, %v1073
    %v1510 = vpack.c.b16 %v1082, %v1078
    %v1511 = vpack.c.b16 %v1083, %v1079
    %v1512 = vpack.c.b16 %v1084, %v1080
    %v1513 = vpack.c.b16 %v1085, %v1081
    %v1514 = vpack.c.b16 %v1090, %v1086
    %v1515 = vpack.c.b16 %v1091, %v1087
    %v1516 = vpack.c.b16 %v1092, %v1088
    %v1517 = vpack.c.b16 %v1093, %v1089
    %v1518 = vpack.c.b16 %v1098, %v1094
    %v1519 = vpack.c.b16 %v1099, %v1095
    %v1520 = vpack.c.b16 %v1100, %v1096
    %v1521 = vpack.c.b16 %v1101, %v1097
    %v1522 = vpack.c.b16 %v1106, %v1102
    %v1523 = vpack.c.b16 %v1107, %v1103
    %v1524 = vpack.c.b16 %v1108, %v1104
    %v1525 = vpack.c.b16 %v1109, %v1105
    %v1526 = vpack.c.b16 %v1114, %v1110
    %v1527 = vpack.c.b16 %v1115, %v1111
    %v1528 = vpack.c.b16 %v1116, %v1112
    %v1529 = vpack.c.b16 %v1117, %v1113
    %v1530 = vpack.c.b16 %v1122, %v1118
    %v1531 = vpack.c.b16 %v1123, %v1119
    %v1532 = vpack.c.b16 %v1124, %v1120
    %v1533 = vpack.c.b16 %v1125, %v1121
    %v1534 = vpack.c.b16 %v1130, %v1126
    %v1535 = vpack.c.b16 %v1131, %v1127
    %v1536 = vpack.c.b16 %v1132, %v1128
    %v1537 = vpack.c.b16 %v1133, %v1129
    %v1538 = vpack.c.b16 %v1138, %v1134
    %v1539 = vpack.c.b16 %v1139, %v1135
    %v1540 = vpack.c.b16 %v1140, %v1136
    %v1541 = vpack.c.b16 %v1141, %v1137
    %v1542 = vpack.c.b16 %v1146, %v1142
    %v1543 = vpack.c.b16 %v1147, %v1143
    %v1544 = vpack.c.b16 %v1148, %v1144
    %v1545 = vpack.c.b16 %v1149, %v1145
    %v1546 = vpack.c.b16 %v1154, %v1150
    %v1547 = vpack.c.b16 %v1155, %v1151
    %v1548 = vpack.c.b16 %v1156, %v1152
    %v1549 = vpack.c.b16 %v1157, %v1153
    %v1550 = vpack.c.b16 %v1162, %v1158
    %v1551 = vpack.c.b16 %v1163, %v1159
    %v1552 = vpack.c.b16 %v1164, %v1160
    %v1553 = vpack.c.b16 %v1165, %v1161
    %v1554 = vpack.c.b16 %v1170, %v1166
    %v1555 = vpack.c.b16 %v1171, %v1167
    %v1556 = vpack.c.b16 %v1172, %v1168
    %v1557 = vpack.c.b16 %v1173, %v1169
    %v1558 = vpack.c.b16 %v1178, %v1174
    %v1559 = vpack.c.b16 %v1179, %v1175
    %v1560 = vpack.c.b16 %v1180, %v1176
    %v1561 = vpack.c.b16 %v1181, %v1177
    %v1562 = vpack.c.b16 %v1186, %v1182
    %v1563 = vpack.c.b16 %v1187, %v1183
    %v1564 = vpack.c.b16 %v1188, %v1184
    %v1565 = vpack.c.b16 %v1189, %v1185
    %v1566 = vpack.c.b16 %v1194, %v1190
    %v1567 = vpack.c.b16 %v1195, %v1191
    %v1568 = vpack.c.b16 %v1196, %v1192
    %v1569 = vpack.c.b16 %v1197, %v1193
    %v1570 = vpack.c.b16 %v1202, %v1198
    %v1571 = vpack.c.b16 %v1203, %v1199
    %v1572 = vpack.c.b16 %v1204, %v1200
    %v1573 = vpack.c.b16 %v1205, %v1201
    %v1574 = vpack.c.b16 %v1210, %v1206
    %v1575 = vpack.c.b16 %v1211, %v1207
    %v1576 = vpack.c.b16 %v1212, %v1208
    %v1577 = vpack.c.b16 %v1213, %v1209
    %v1578 = vpack.c.b16 %v1218, %v1214
    %v1579 = vpack.c.b16 %v1219, %v1215
    %v1580 = vpack.c.b16 %v1220, %v1216
    %v1581 = vpack.c.b16 %v1221, %v1217
    %v1582 = vpack.c.b16 %v1226, %v1222
    %v1583 = vpack.c.b16 %v1227, %v1223
    %v1584 = vpack.c.b16 %v1228, %v1224
    %v1585 = vpack.c.b16 %v1229, %v1225
    %v1586 = vpack.c.b16 %v1234, %v1230
    %v1587 = vpack.c.b16 %v1235, %v1231
    %v1588 = vpack.c.b16 %v1236, %v1232
    %v1589 = vpack.c.b16 %v1237, %v1233
    %v1590 = vpack.c.b16 %v1242, %v1238
    %v1591 = vpack.c.b16 %v1243, %v1239
    %v1592 = vpack.c.b16 %v1244, %v1240
    %v1593 = vpack.c.b16 %v1245, %v1241
    %v1594 = vpack.c.b16 %v1250, %v1246
    %v1595 = vpack.c.b16 %v1251, %v1247
    %v1596 = vpack.c.b16 %v1252, %v1248
    %v1597 = vpack.c.b16 %v1253, %v1249
    %v1598 = vpack.c.b16 %v1258, %v1254
    %v1599 = vpack.c.b16 %v1259, %v1255
    %v1600 = vpack.c.b16 %v1260, %v1256
    %v1601 = vpack.c.b16 %v1261, %v1257
    %v1602 = vpack.c.b16 %v1266, %v1262
    %v1603 = vpack.c.b16 %v1267, %v1263
    %v1604 = vpack.c.b16 %v1268, %v1264
    %v1605 = vpack.c.b16 %v1269, %v1265
    %v1606 = vpack.c.b16 %v1274, %v1270
    %v1607 = vpack.c.b16 %v1275, %v1271
    %v1608 = vpack.c.b16 %v1276, %v1272
    %v1609 = vpack.c.b16 %v1277, %v1273
    %v1610 = vpack.c.b16 %v1282, %v1278
    %v1611 = vpack.c.b16 %v1283, %v1279
    %v1612 = vpack.c.b16 %v1284, %v1280
    %v1613 = vpack.c.b16 %v1285, %v1281
    %v1614 = vpack.c.b16 %v1290, %v1286
    %v1615 = vpack.c.b16 %v1291, %v1287
    %v1616 = vpack.c.b16 %v1292, %v1288
    %v1617 = vpack.c.b16 %v1293, %v1289
    %v1618 = vpack.c.b16 %v1298, %v1294
    %v1619 = vpack.c.b16 %v1299, %v1295
    %v1620 = vpack.c.b16 %v1300, %v1296
    %v1621 = vpack.c.b16 %v1301, %v1297
    %v1622 = vpack.c.b16 %v1306, %v1302
    %v1623 = vpack.c.b16 %v1307, %v1303
    %v1624 = vpack.c.b16 %v1308, %v1304
    %v1625 = vpack.c.b16 %v1309, %v1305
    %v1626 = vpack.c.b16 %v1314, %v1310
    %v1627 = vpack.c.b16 %v1315, %v1311
    %v1628 = vpack.c.b16 %v1316, %v1312
    %v1629 = vpack.c.b16 %v1317, %v1313
    %v1630 = vpack.c.b16 %v1322, %v1318
    %v1631 = vpack.c.b16 %v1323, %v1319
    %v1632 = vpack.c.b16 %v1324, %v1320
    %v1633 = vpack.c.b16 %v1325, %v1321
    %v1634 = vpack.c.b16 %v1330, %v1326
    %v1635 = vpack.c.b16 %v1331, %v1327
    %v1636 = vpack.c.b16 %v1332, %v1328
    %v1637 = vpack.c.b16 %v1333, %v1329
    %v1638 = vpack.c.b16 %v1338, %v1334
    %v1639 = vpack.c.b16 %v1339, %v1335
    %v1640 = vpack.c.b16 %v1340, %v1336
    %v1641 = vpack.c.b16 %v1341, %v1337
    %v1642 = vpack.c.b16 %v1346, %v1342
    %v1643 = vpack.c.b16 %v1347, %v1343
    %v1644 = vpack.c.b16 %v1348, %v1344
    %v1645 = vpack.c.b16 %v1349, %v1345
    %v1646 = vpack.c.b16 %v1354, %v1350
    %v1647 = vpack.c.b16 %v1355, %v1351
    %v1648 = vpack.c.b16 %v1356, %v1352
    %v1649 = vpack.c.b16 %v1357, %v1353
    %v1650 = vpack.c.b16 %v1362, %v1358
    %v1651 = vpack.c.b16 %v1363, %v1359
    %v1652 = vpack.c.b16 %v1364, %v1360
    %v1653 = vpack.c.b16 %v1365, %v1361
    %v1654 = vpack.c.b16 %v1370, %v1366
    %v1655 = vpack.c.b16 %v1371, %v1367
    %v1656 = vpack.c.b16 %v1372, %v1368
    %v1657 = vpack.c.b16 %v1373, %v1369
    %v1658 = vpack.c.b16 %v1378, %v1374
    %v1659 = vpack.c.b16 %v1379, %v1375
    %v1660 = vpack.c.b16 %v1380, %v1376
    %v1661 = vpack.c.b16 %v1381, %v1377
    %v1662 = vpack.c.b16 %v1386, %v1382
    %v1663 = vpack.c.b16 %v1387, %v1383
    %v1664 = vpack.c.b16 %v1388, %v1384
    %v1665 = vpack.c.b16 %v1389, %v1385
    %v1666 = vpack.c.b16 %v1394, %v1390
    %v1667 = vpack.c.b16 %v1395, %v1391
    %v1668 = vpack.c.b16 %v1396, %v1392
    %v1669 = vpack.c.b16 %v1397, %v1393
    %v1670 = vpack.c.b16 %v1402, %v1398
    %v1671 = vpack.c.b16 %v1403, %v1399
    %v1672 = vpack.c.b16 %v1404, %v1400
    %v1673 = vpack.c.b16 %v1405, %v1401
    %v1674 = vpack.c.b16 %v1410, %v1406
    %v1675 = vpack.c.b16 %v1411, %v1407
    %v1676 = vpack.c.b16 %v1412, %v1408
    %v1677 = vpack.c.b16 %v1413, %v1409
    %v1678 = vpack.c.b16 %v1418, %v1414
    %v1679 = vpack.c.b16 %v1419, %v1415
    %v1680 = vpack.c.b16 %v1420, %v1416
    %v1681 = vpack.c.b16 %v1421, %v1417
    %v1682 = vpack.c.b16 %v1426, %v1422
    %v1683 = vpack.c.b16 %v1427, %v1423
    %v1684 = vpack.c.b16 %v1428, %v1424
    %v1685 = vpack.c.b16 %v1429, %v1425
    %1942 = vmatprep.subr.bf16.mxu0 %v1431
    %1943 = vmatpush1.bf16.msra.mxu0 %v1430
    %1944 = vmatprep.subr.bf16.mxu0 %v1435
    %1945 = vmatpush1.bf16.msra.mxu0 %v1434
    %1946 = vmatprep.subr.bf16.mxu0 %v1439
    %1947 = vmatpush1.bf16.msra.mxu0 %v1438
    %1948 = vmatprep.subr.bf16.mxu0 %v1443
    %1949 = vmatpush1.bf16.msra.mxu0 %v1442
    %1950 = vmatprep.subr.bf16.mxu0 %v1447
    %1951 = vmatpush1.bf16.msra.mxu0 %v1446
    %1952 = vmatprep.subr.bf16.mxu0 %v1451
    %1953 = vmatpush1.bf16.msra.mxu0 %v1450
    %1954 = vmatprep.subr.bf16.mxu0 %v1455
    %1955 = vmatpush1.bf16.msra.mxu0 %v1454
    %1956 = vmatprep.subr.bf16.mxu0 %v1459
    %1957 = vmatpush1.bf16.msra.mxu0 %v1458
    %1958 = vmatprep.subr.bf16.mxu0 %v1463
    %1959 = vmatpush1.bf16.msra.mxu0 %v1462
    %1960 = vmatprep.subr.bf16.mxu0 %v1467
    %1961 = vmatpush1.bf16.msra.mxu0 %v1466
    %1962 = vmatprep.subr.bf16.mxu0 %v1471
    %1963 = vmatpush1.bf16.msra.mxu0 %v1470
    %1964 = vmatprep.subr.bf16.mxu0 %v1475
    %1965 = vmatpush1.bf16.msra.mxu0 %v1474
    %1966 = vmatprep.subr.bf16.mxu0 %v1479
    %1967 = vmatpush1.bf16.msra.mxu0 %v1478
    %1968 = vmatprep.subr.bf16.mxu0 %v1483
    %1969 = vmatpush1.bf16.msra.mxu0 %v1482
    %1970 = vmatprep.subr.bf16.mxu0 %v1487
    %1971 = vmatpush1.bf16.msra.mxu0 %v1486
    %1972 = vmatprep.subr.bf16.mxu0 %v1491
    %1973 = vmatpush1.bf16.msra.mxu0 %v1490
    %1974 = vmatprep.mubr.bf16.mxu0 %v377
    %1975 = vmatmul.mubr.bf16.gmra.mrb[0].mxu0 %v376
    %v1976 = vpop.f32.mrb[0].mxu0
    %v1977 = vadd.f32 %v645, %v1976
    %v1978 = vpop.f32.mrb[0].mxu0
    %v1979 = vadd.f32 %v649, %v1978
    %v1980 = vpop.f32.mrb[0].mxu0
    %v1981 = vpop.f32.mrb[0].mxu0
    %1982 = vdwg.mxu0
    %1983 = vmatprep.subr.bf16.mxu0 %v1495
    %1984 = vmatpush1.bf16.msra.mxu0 %v1494
    %1985 = vmatprep.subr.bf16.mxu0 %v1499
    %1986 = vmatpush1.bf16.msra.mxu0 %v1498
    %1987 = vmatprep.subr.bf16.mxu0 %v1503
    %1988 = vmatpush1.bf16.msra.mxu0 %v1502
    %1989 = vmatprep.subr.bf16.mxu0 %v1507
    %1990 = vmatpush1.bf16.msra.mxu0 %v1506
    %1991 = vmatprep.subr.bf16.mxu0 %v1511
    %1992 = vmatpush1.bf16.msra.mxu0 %v1510
    %1993 = vmatprep.subr.bf16.mxu0 %v1515
    %1994 = vmatpush1.bf16.msra.mxu0 %v1514
    %1995 = vmatprep.subr.bf16.mxu0 %v1519
    %1996 = vmatpush1.bf16.msra.mxu0 %v1518
    %1997 = vmatprep.subr.bf16.mxu0 %v1523
    %1998 = vmatpush1.bf16.msra.mxu0 %v1522
    %1999 = vmatprep.subr.bf16.mxu0 %v1527
    %2000 = vmatpush1.bf16.msra.mxu0 %v1526
    %2001 = vmatprep.subr.bf16.mxu0 %v1531
    %2002 = vmatpush1.bf16.msra.mxu0 %v1530
    %2003 = vmatprep.subr.bf16.mxu0 %v1535
    %2004 = vmatpush1.bf16.msra.mxu0 %v1534
    %2005 = vmatprep.subr.bf16.mxu0 %v1539
    %2006 = vmatpush1.bf16.msra.mxu0 %v1538
    %2007 = vmatprep.subr.bf16.mxu0 %v1543
    %2008 = vmatpush1.bf16.msra.mxu0 %v1542
    %2009 = vmatprep.subr.bf16.mxu0 %v1547
    %2010 = vmatpush1.bf16.msra.mxu0 %v1546
    %2011 = vmatprep.subr.bf16.mxu0 %v1551
    %2012 = vmatpush1.bf16.msra.mxu0 %v1550
    %2013 = vmatprep.subr.bf16.mxu0 %v1555
    %2014 = vmatpush1.bf16.msra.mxu0 %v1554
    %2015 = vmatprep.mubr.bf16.mxu0 %v379
    %2016 = vmatmul.mubr.bf16.gmra.mrb[0].mxu0 %v378
    %v2017 = vpop.f32.mrb[0].mxu0
    %v2018 = vadd.f32 %v1977, %v2017
    %v2019 = vpop.f32.mrb[0].mxu0
    %v2020 = vadd.f32 %v1979, %v2019
    %v2021 = vpop.f32.mrb[0].mxu0
    %v2022 = vpop.f32.mrb[0].mxu0
    %2023 = vdwg.mxu0
    %2024 = vmatprep.subr.bf16.mxu0 %v1559
    %2025 = vmatpush1.bf16.msra.mxu0 %v1558
    %2026 = vmatprep.subr.bf16.mxu0 %v1563
    %2027 = vmatpush1.bf16.msra.mxu0 %v1562
    %2028 = vmatprep.subr.bf16.mxu0 %v1567
    %2029 = vmatpush1.bf16.msra.mxu0 %v1566
    %2030 = vmatprep.subr.bf16.mxu0 %v1571
    %2031 = vmatpush1.bf16.msra.mxu0 %v1570
    %2032 = vmatprep.subr.bf16.mxu0 %v1575
    %2033 = vmatpush1.bf16.msra.mxu0 %v1574
    %2034 = vmatprep.subr.bf16.mxu0 %v1579
    %2035 = vmatpush1.bf16.msra.mxu0 %v1578
    %2036 = vmatprep.subr.bf16.mxu0 %v1583
    %2037 = vmatpush1.bf16.msra.mxu0 %v1582
    %2038 = vmatprep.subr.bf16.mxu0 %v1587
    %2039 = vmatpush1.bf16.msra.mxu0 %v1586
    %2040 = vmatprep.subr.bf16.mxu0 %v1591
    %2041 = vmatpush1.bf16.msra.mxu0 %v1590
    %2042 = vmatprep.subr.bf16.mxu0 %v1595
    %2043 = vmatpush1.bf16.msra.mxu0 %v1594
    %2044 = vmatprep.subr.bf16.mxu0 %v1599
    %2045 = vmatpush1.bf16.msra.mxu0 %v1598
    %2046 = vmatprep.subr.bf16.mxu0 %v1603
    %2047 = vmatpush1.bf16.msra.mxu0 %v1602
    %2048 = vmatprep.subr.bf16.mxu0 %v1607
    %2049 = vmatpush1.bf16.msra.mxu0 %v1606
    %2050 = vmatprep.subr.bf16.mxu0 %v1611
    %2051 = vmatpush1.bf16.msra.mxu0 %v1610
    %2052 = vmatprep.subr.bf16.mxu0 %v1615
    %2053 = vmatpush1.bf16.msra.mxu0 %v1614
    %2054 = vmatprep.subr.bf16.mxu0 %v1619
    %2055 = vmatpush1.bf16.msra.mxu0 %v1618
    %2056 = vmatprep.mubr.bf16.mxu0 %v381
    %2057 = vmatmul.mubr.bf16.gmra.mrb[0].mxu0 %v380
    %v2058 = vpop.f32.mrb[0].mxu0
    %v2059 = vadd.f32 %v2018, %v2058
    %v2060 = vpop.f32.mrb[0].mxu0
    %v2061 = vadd.f32 %v2020, %v2060
    %v2062 = vpop.f32.mrb[0].mxu0
    %v2063 = vpop.f32.mrb[0].mxu0
    %2064 = vdwg.mxu0
    %2065 = vmatprep.subr.bf16.mxu0 %v1623
    %2066 = vmatpush1.bf16.msra.mxu0 %v1622
    %2067 = vmatprep.subr.bf16.mxu0 %v1627
    %2068 = vmatpush1.bf16.msra.mxu0 %v1626
    %2069 = vmatprep.subr.bf16.mxu0 %v1631
    %2070 = vmatpush1.bf16.msra.mxu0 %v1630
    %2071 = vmatprep.subr.bf16.mxu0 %v1635
    %2072 = vmatpush1.bf16.msra.mxu0 %v1634
    %2073 = vmatprep.subr.bf16.mxu0 %v1639
    %2074 = vmatpush1.bf16.msra.mxu0 %v1638
    %2075 = vmatprep.subr.bf16.mxu0 %v1643
    %2076 = vmatpush1.bf16.msra.mxu0 %v1642
    %2077 = vmatprep.subr.bf16.mxu0 %v1647
    %2078 = vmatpush1.bf16.msra.mxu0 %v1646
    %2079 = vmatprep.subr.bf16.mxu0 %v1651
    %2080 = vmatpush1.bf16.msra.mxu0 %v1650
    %2081 = vmatprep.subr.bf16.mxu0 %v1655
    %2082 = vmatpush1.bf16.msra.mxu0 %v1654
    %2083 = vmatprep.subr.bf16.mxu0 %v1659
    %2084 = vmatpush1.bf16.msra.mxu0 %v1658
    %2085 = vmatprep.subr.bf16.mxu0 %v1663
    %2086 = vmatpush1.bf16.msra.mxu0 %v1662
    %2087 = vmatprep.subr.bf16.mxu0 %v1667
    %2088 = vmatpush1.bf16.msra.mxu0 %v1666
    %2089 = vmatprep.subr.bf16.mxu0 %v1671
    %2090 = vmatpush1.bf16.msra.mxu0 %v1670
    %2091 = vmatprep.subr.bf16.mxu0 %v1675
    %2092 = vmatpush1.bf16.msra.mxu0 %v1674
    %2093 = vmatprep.subr.bf16.mxu0 %v1679
    %2094 = vmatpush1.bf16.msra.mxu0 %v1678
    %2095 = vmatprep.subr.bf16.mxu0 %v1683
    %2096 = vmatpush1.bf16.msra.mxu0 %v1682
    %2097 = vmatprep.mubr.bf16.mxu0 %v383
    %2098 = vmatmul.mubr.bf16.gmra.mrb[0].mxu0 %v382
    %v2099 = vpop.f32.mrb[0].mxu0
    %v2100 = vadd.f32 %v2059, %v2099
    %v2101 = vpop.f32.mrb[0].mxu0
    %v2102 = vadd.f32 %v2061, %v2101
    %v2103 = vpop.f32.mrb[0].mxu0
    %v2104 = vpop.f32.mrb[0].mxu0
    %2105 = vdwg.mxu0
    %2106 = vmatprep.subr.bf16.mxu0 %v1433
    %2107 = vmatpush1.bf16.msra.mxu0 %v1432
    %2108 = vmatprep.subr.bf16.mxu0 %v1437
    %2109 = vmatpush1.bf16.msra.mxu0 %v1436
    %2110 = vmatprep.subr.bf16.mxu0 %v1441
    %2111 = vmatpush1.bf16.msra.mxu0 %v1440
    %2112 = vmatprep.subr.bf16.mxu0 %v1445
    %2113 = vmatpush1.bf16.msra.mxu0 %v1444
    %2114 = vmatprep.subr.bf16.mxu0 %v1449
    %2115 = vmatpush1.bf16.msra.mxu0 %v1448
    %2116 = vmatprep.subr.bf16.mxu0 %v1453
    %2117 = vmatpush1.bf16.msra.mxu0 %v1452
    %2118 = vmatprep.subr.bf16.mxu0 %v1457
    %2119 = vmatpush1.bf16.msra.mxu0 %v1456
    %2120 = vmatprep.subr.bf16.mxu0 %v1461
    %2121 = vmatpush1.bf16.msra.mxu0 %v1460
    %2122 = vmatprep.subr.bf16.mxu0 %v1465
    %2123 = vmatpush1.bf16.msra.mxu0 %v1464
    %2124 = vmatprep.subr.bf16.mxu0 %v1469
    %2125 = vmatpush1.bf16.msra.mxu0 %v1468
    %2126 = vmatprep.subr.bf16.mxu0 %v1473
    %2127 = vmatpush1.bf16.msra.mxu0 %v1472
    %2128 = vmatprep.subr.bf16.mxu0 %v1477
    %2129 = vmatpush1.bf16.msra.mxu0 %v1476
    %2130 = vmatprep.subr.bf16.mxu0 %v1481
    %2131 = vmatpush1.bf16.msra.mxu0 %v1480
    %2132 = vmatprep.subr.bf16.mxu0 %v1485
    %2133 = vmatpush1.bf16.msra.mxu0 %v1484
    %2134 = vmatprep.subr.bf16.mxu0 %v1489
    %2135 = vmatpush1.bf16.msra.mxu0 %v1488
    %2136 = vmatprep.subr.bf16.mxu0 %v1493
    %2137 = vmatpush1.bf16.msra.mxu0 %v1492
    %2138 = vmatprep.mubr.bf16.mxu0 %v377
    %2139 = vmatmul.mubr.bf16.gmra.mrb[0].mxu0 %v376
    %v2140 = vpop.f32.mrb[0].mxu0
    %v2141 = vadd.f32 %v653, %v2140
    %v2142 = vpop.f32.mrb[0].mxu0
    %v2143 = vadd.f32 %v657, %v2142
    %v2144 = vpop.f32.mrb[0].mxu0
    %v2145 = vpop.f32.mrb[0].mxu0
    %2146 = vdwg.mxu0
    %2147 = vmatprep.subr.bf16.mxu0 %v1497
    %2148 = vmatpush1.bf16.msra.mxu0 %v1496
    %2149 = vmatprep.subr.bf16.mxu0 %v1501
    %2150 = vmatpush1.bf16.msra.mxu0 %v1500
    %2151 = vmatprep.subr.bf16.mxu0 %v1505
    %2152 = vmatpush1.bf16.msra.mxu0 %v1504
    %2153 = vmatprep.subr.bf16.mxu0 %v1509
    %2154 = vmatpush1.bf16.msra.mxu0 %v1508
    %2155 = vmatprep.subr.bf16.mxu0 %v1513
    %2156 = vmatpush1.bf16.msra.mxu0 %v1512
    %2157 = vmatprep.subr.bf16.mxu0 %v1517
    %2158 = vmatpush1.bf16.msra.mxu0 %v1516
    %2159 = vmatprep.subr.bf16.mxu0 %v1521
    %2160 = vmatpush1.bf16.msra.mxu0 %v1520
    %2161 = vmatprep.subr.bf16.mxu0 %v1525
    %2162 = vmatpush1.bf16.msra.mxu0 %v1524
    %2163 = vmatprep.subr.bf16.mxu0 %v1529
    %2164 = vmatpush1.bf16.msra.mxu0 %v1528
    %2165 = vmatprep.subr.bf16.mxu0 %v1533
    %2166 = vmatpush1.bf16.msra.mxu0 %v1532
    %2167 = vmatprep.subr.bf16.mxu0 %v1537
    %2168 = vmatpush1.bf16.msra.mxu0 %v1536
    %2169 = vmatprep.subr.bf16.mxu0 %v1541
    %2170 = vmatpush1.bf16.msra.mxu0 %v1540
    %2171 = vmatprep.subr.bf16.mxu0 %v1545
    %2172 = vmatpush1.bf16.msra.mxu0 %v1544
    %2173 = vmatprep.subr.bf16.mxu0 %v1549
    %2174 = vmatpush1.bf16.msra.mxu0 %v1548
    %2175 = vmatprep.subr.bf16.mxu0 %v1553
    %2176 = vmatpush1.bf16.msra.mxu0 %v1552
    %2177 = vmatprep.subr.bf16.mxu0 %v1557
    %2178 = vmatpush1.bf16.msra.mxu0 %v1556
    %2179 = vmatprep.mubr.bf16.mxu0 %v379
    %2180 = vmatmul.mubr.bf16.gmra.mrb[0].mxu0 %v378
    %v2181 = vpop.f32.mrb[0].mxu0
    %v2182 = vadd.f32 %v2141, %v2181
    %v2183 = vpop.f32.mrb[0].mxu0
    %v2184 = vadd.f32 %v2143, %v2183
    %v2185 = vpop.f32.mrb[0].mxu0
    %v2186 = vpop.f32.mrb[0].mxu0
    %2187 = vdwg.mxu0
    %2188 = vmatprep.subr.bf16.mxu0 %v1561
    %2189 = vmatpush1.bf16.msra.mxu0 %v1560
    %2190 = vmatprep.subr.bf16.mxu0 %v1565
    %2191 = vmatpush1.bf16.msra.mxu0 %v1564
    %2192 = vmatprep.subr.bf16.mxu0 %v1569
    %2193 = vmatpush1.bf16.msra.mxu0 %v1568
    %2194 = vmatprep.subr.bf16.mxu0 %v1573
    %2195 = vmatpush1.bf16.msra.mxu0 %v1572
    %2196 = vmatprep.subr.bf16.mxu0 %v1577
    %2197 = vmatpush1.bf16.msra.mxu0 %v1576
    %2198 = vmatprep.subr.bf16.mxu0 %v1581
    %2199 = vmatpush1.bf16.msra.mxu0 %v1580
    %2200 = vmatprep.subr.bf16.mxu0 %v1585
    %2201 = vmatpush1.bf16.msra.mxu0 %v1584
    %2202 = vmatprep.subr.bf16.mxu0 %v1589
    %2203 = vmatpush1.bf16.msra.mxu0 %v1588
    %2204 = vmatprep.subr.bf16.mxu0 %v1593
    %2205 = vmatpush1.bf16.msra.mxu0 %v1592
    %2206 = vmatprep.subr.bf16.mxu0 %v1597
    %2207 = vmatpush1.bf16.msra.mxu0 %v1596
    %2208 = vmatprep.subr.bf16.mxu0 %v1601
    %2209 = vmatpush1.bf16.msra.mxu0 %v1600
    %2210 = vmatprep.subr.bf16.mxu0 %v1605
    %2211 = vmatpush1.bf16.msra.mxu0 %v1604
    %2212 = vmatprep.subr.bf16.mxu0 %v1609
    %2213 = vmatpush1.bf16.msra.mxu0 %v1608
    %2214 = vmatprep.subr.bf16.mxu0 %v1613
    %2215 = vmatpush1.bf16.msra.mxu0 %v1612
    %2216 = vmatprep.subr.bf16.mxu0 %v1617
    %2217 = vmatpush1.bf16.msra.mxu0 %v1616
    %2218 = vmatprep.subr.bf16.mxu0 %v1621
    %2219 = vmatpush1.bf16.msra.mxu0 %v1620
    %2220 = vmatprep.mubr.bf16.mxu0 %v381
    %2221 = vmatmul.mubr.bf16.gmra.mrb[0].mxu0 %v380
    %v2222 = vpop.f32.mrb[0].mxu0
    %v2223 = vadd.f32 %v2182, %v2222
    %v2224 = vpop.f32.mrb[0].mxu0
    %v2225 = vadd.f32 %v2184, %v2224
    %v2226 = vpop.f32.mrb[0].mxu0
    %v2227 = vpop.f32.mrb[0].mxu0
    %2228 = vdwg.mxu0
    %2229 = vmatprep.subr.bf16.mxu0 %v1625
    %2230 = vmatpush1.bf16.msra.mxu0 %v1624
    %2231 = vmatprep.subr.bf16.mxu0 %v1629
    %2232 = vmatpush1.bf16.msra.mxu0 %v1628
    %2233 = vmatprep.subr.bf16.mxu0 %v1633
    %2234 = vmatpush1.bf16.msra.mxu0 %v1632
    %2235 = vmatprep.subr.bf16.mxu0 %v1637
    %2236 = vmatpush1.bf16.msra.mxu0 %v1636
    %2237 = vmatprep.subr.bf16.mxu0 %v1641
    %2238 = vmatpush1.bf16.msra.mxu0 %v1640
    %2239 = vmatprep.subr.bf16.mxu0 %v1645
    %2240 = vmatpush1.bf16.msra.mxu0 %v1644
    %2241 = vmatprep.subr.bf16.mxu0 %v1649
    %2242 = vmatpush1.bf16.msra.mxu0 %v1648
    %2243 = vmatprep.subr.bf16.mxu0 %v1653
    %2244 = vmatpush1.bf16.msra.mxu0 %v1652
    %2245 = vmatprep.subr.bf16.mxu0 %v1657
    %2246 = vmatpush1.bf16.msra.mxu0 %v1656
    %2247 = vmatprep.subr.bf16.mxu0 %v1661
    %2248 = vmatpush1.bf16.msra.mxu0 %v1660
    %2249 = vmatprep.subr.bf16.mxu0 %v1665
    %2250 = vmatpush1.bf16.msra.mxu0 %v1664
    %2251 = vmatprep.subr.bf16.mxu0 %v1669
    %2252 = vmatpush1.bf16.msra.mxu0 %v1668
    %2253 = vmatprep.subr.bf16.mxu0 %v1673
    %2254 = vmatpush1.bf16.msra.mxu0 %v1672
    %2255 = vmatprep.subr.bf16.mxu0 %v1677
    %2256 = vmatpush1.bf16.msra.mxu0 %v1676
    %2257 = vmatprep.subr.bf16.mxu0 %v1681
    %2258 = vmatpush1.bf16.msra.mxu0 %v1680
    %2259 = vmatprep.subr.bf16.mxu0 %v1685
    %2260 = vmatpush1.bf16.msra.mxu0 %v1684
    %2261 = vmatprep.mubr.bf16.mxu0 %v383
    %2262 = vmatmul.mubr.bf16.gmra.mrb[0].mxu0 %v382
    %v2263 = vpop.f32.mrb[0].mxu0
    %v2264 = vadd.f32 %v2223, %v2263
    %v2265 = vpop.f32.mrb[0].mxu0
    %v2266 = vadd.f32 %v2225, %v2265
    %v2267 = vpop.f32.mrb[0].mxu0
    %v2268 = vpop.f32.mrb[0].mxu0
    %2269 = vdwg.mxu0
    %v2270 = vmax.f32 %v2100, 0.0
    %v2271 = vmax.f32 %v2102, 0.0
    %v2272 = vmax.f32 %v2264, 0.0
    %v2273 = vmax.f32 %v2266, 0.0
    %v2274 = vld [vmem:[%s6] sm:$0xf]
    %v2276 = vlaneseq
    %v2277 = vshrl.u32 %v2276, 7
    %v2278 = vsub.s32 0, %v2277
    %v2279 = vrot.slane %v2274, %v2278
    %v2280 = vlaneseq
    %v2281 = vshrl.u32 %v2280, 7
    %v2282 = vsub.s32 1, %v2281
    %v2283 = vrot.slane %v2274, %v2282
    %v2284 = vlaneseq
    %v2285 = vshrl.u32 %v2284, 7
    %v2286 = vsub.s32 2, %v2285
    %v2287 = vrot.slane %v2274, %v2286
    %v2288 = vlaneseq
    %v2289 = vshrl.u32 %v2288, 7
    %v2290 = vsub.s32 3, %v2289
    %v2291 = vrot.slane %v2274, %v2290
    %v2296 = vmul.f32 %v2270, %v2279
    %v2297 = vmul.f32 %v2271, %v2283
    %v2298 = vmul.f32 %v2272, %v2287
    %v2299 = vmul.f32 %v2273, %v2291
    %v2300 = vadd.f32 %v2296, %v2297
    %v2301 = vadd.f32 %v2300, %v2298
    %v2302 = vadd.f32 %v2301, %v2299
    %2303 = vadd.xlane.f32.xlu0 %v2302
    %v2304 = vpop.xlane.xlu0 %2303
    %v2305 = vld [vmem:[#allocation2] sm:$0x1]
    %v2307 = vlaneseq
    %v2308 = vshrl.u32 %v2307, 7
    %v2309 = vsub.s32 0, %v2308
    %v2310 = vrot.slane %v2305, %v2309
    %v2312 = vadd.f32 %v2304, %v2310
    %v2313 = vld [vmem:[%s1] sm:$0xff]
    %v2314 = vadd.f32 %v2313, %v2312
    %v2315 = vxor.u32 %v2314, 2147483648
    %v2316 = vmul.f32 %v2315, 1.442695
    %v2317 = vpow.pop %v2316
    %v2318 = vadd.f32 %v2317, 1.0
    %v2319 = vrcp.pop %v2318
    %v2320 = vmul.f32 1.0, %v2319
    %vm2321 = vcmask 7168
    %2322 = vst.msk [vmem:[%s8] sm:$0xff] %vm2321, %v2320
    // Predicated region
    $region42: #{tpu_custom_call.1} parent=1 // pred_check
      _
    $region43: #{tpu_custom_call.1} parent=1 // pred_check_branch
      %2324 = sbr.rel (0) target = $region45
    $region44: #{tpu_custom_call.1} parent=1 // pred_region
      _
    $region45: #{tpu_custom_call.1} parent=1 // pred_fallthru
      _
    // Predicated region
    $region46: #{tpu_custom_call.1} parent=1 // pred_check
      _
    $region47: #{tpu_custom_call.1} parent=1 // pred_check_branch
      %2326 = sbr.rel (0) target = $region49
    $region48: #{tpu_custom_call.1} parent=1 // pred_region
      _
    $region49: #{tpu_custom_call.1} parent=1 // pred_fallthru
      _
    %2327 = vsyncpa [#allocation4], 1
    %2328 = vsyncpa [#allocation6], 1

</llo_original>
